<compile_context>
chip_gen: v5e
topology: v5e:2x2
jax: 0.10.0
libtpu: 0.0.40
codegen_flags: <defaults>
</compile_context>

<pallas_src>
import functools

import jax
import jax.numpy as jnp
from jax.experimental import pallas as pl
from jax.experimental.pallas import tpu as pltpu

HIDDEN = 128


def _round_up(n: int, m: int) -> int:
    return ((n + m - 1) // m) * m


def mlp_kernel(x_ref, params_ref, w2_ref, w3_ref, o_ref, *, precision):
    # x_ref:      (1, TM)           batch elements along lanes (lane-dense I/O)
    # params_ref: (HIDDEN, 3)       packed columns: [w1, b1, b2]
    # w2_ref:     (HIDDEN, HIDDEN)  PyTorch W2 (column layout: h2 = W2 @ h1 + b2)
    # w3_ref:     (1, HIDDEN)       PyTorch W3 row
    # o_ref:      (1, TM)
    x = x_ref[...]                               # (1, TM)
    w1c = params_ref[:, 0:1]                     # (HIDDEN, 1)
    b1c = params_ref[:, 1:2]                     # (HIDDEN, 1)
    b2c = params_ref[:, 2:3]                     # (HIDDEN, 1)

    # Layer 1: Linear(1,128)+ReLU is an outer-product broadcast (VPU).
    h1 = jnp.maximum(w1c * x + b1c, 0.0)         # (HIDDEN, TM)

    # Layer 2: Linear(128,128)+ReLU on the MXU, M=K=128, N=TM, explicit precision.
    h2 = jnp.dot(w2_ref[...], h1,
                 preferred_element_type=jnp.float32,
                 precision=precision)
    h2 = jnp.maximum(h2 + b2c, 0.0)              # (HIDDEN, TM)

    # Layer 3: Linear(128,1,bias=False) as a second MXU dot (keeps output lane-dense,
    # offloads the multiply-reduce from the saturated VPU slot).
    o_ref[...] = jnp.dot(w3_ref[...], h2,
                         preferred_element_type=jnp.float32,
                         precision=precision)    # (1, TM)


def sim_model_forward(x, w1, b1, w2, b2, w3, *, tm=8192,
                      precision=jax.lax.Precision.HIGHEST):
    """x: (N, 1) float32. PyTorch-convention params:
       w1: (128, 1), b1: (128,), w2: (128, 128), b2: (128,), w3: (1, 128).

       precision: jax.lax.Precision.HIGHEST (default) for f32 parity with PyTorch,
       or Precision.DEFAULT to accept bf16 MXU passes for peak matmul rate."""
    N = x.shape[0]

    # Round any user tm up to a multiple of 256 (lane tiling + MXU friendliness).
    tm = _round_up(max(int(tm), 256), 256)

    n256 = _round_up(max(N, 1), 256)
    if n256 >= 512:
        # Cap the tile so the grid keeps >= 2 steps when there is enough work:
        # lets the "parallel" axis shard across both TensorCores on v7x.
        half = _round_up((n256 + 1) // 2, 256)
        tm_eff = min(tm, half)
    else:
        tm_eff = n256                            # tiny batch: single small tile
    padded = _round_up(max(N, 1), tm_eff)

    # Glue: batch on the lane axis; zero-pad the tail (sliced off after the call).
    x_row = x.reshape(1, -1).astype(jnp.float32)
    x_lanes = jnp.pad(x_row, ((0, 0), (0, padded - N)))

    # Pack the three tiny per-feature vectors into one (HIDDEN, 3) column block.
    params = jnp.stack(
        [w1.reshape(HIDDEN), b1.reshape(HIDDEN), b2.reshape(HIDDEN)],
        axis=1).astype(jnp.float32)              # (128, 3)
    w3_row = w3.reshape(1, HIDDEN).astype(jnp.float32)

    grid = (padded // tm_eff,)

    kernel = functools.partial(mlp_kernel, precision=precision)

    out = pl.pallas_call(
        kernel,
        out_shape=jax.ShapeDtypeStruct((1, padded), jnp.float32),
        grid_spec=pltpu.PrefetchScalarGridSpec(
            num_scalar_prefetch=0,
            grid=grid,
            in_specs=[
                pl.BlockSpec((1, tm_eff), lambda i: (0, i)),        # x lane tile
                pl.BlockSpec((HIDDEN, 3), lambda i: (0, 0)),        # packed [w1,b1,b2]
                pl.BlockSpec((HIDDEN, HIDDEN), lambda i: (0, 0)),   # W2 (resident)
                pl.BlockSpec((1, HIDDEN), lambda i: (0, 0)),        # W3 row (resident)
            ],
            out_specs=pl.BlockSpec((1, tm_eff), lambda i: (0, i)),
        ),
        compiler_params=pltpu.CompilerParams(
            dimension_semantics=("parallel",),
            vmem_limit_bytes=64 * 1024 * 1024),
    )(x_lanes, params, w2.astype(jnp.float32), w3_row)

    return out[0, :N].reshape(N, 1)


if __name__ == "__main__":
    key = jax.random.PRNGKey(0)
    k_x, k_w1, k_b1, k_w2, k_b2, k_w3 = jax.random.split(key, 6)

    N = 16  # small batch; wrapper pads to a 256-wide lane tile and slices back
    x = jax.random.normal(k_x, (N, 1), dtype=jnp.float32)

    # Deterministic params in PyTorch shapes: Linear(in, out).weight is (out, in).
    w1 = jax.random.normal(k_w1, (HIDDEN, 1), dtype=jnp.float32) * 0.5
    b1 = jax.random.normal(k_b1, (HIDDEN,), dtype=jnp.float32) * 0.1
    w2 = jax.random.normal(k_w2, (HIDDEN, HIDDEN), dtype=jnp.float32) * (1.0 / jnp.sqrt(HIDDEN))
    b2 = jax.random.normal(k_b2, (HIDDEN,), dtype=jnp.float32) * 0.1
    w3 = jax.random.normal(k_w3, (1, HIDDEN), dtype=jnp.float32) * (1.0 / jnp.sqrt(HIDDEN))

    out = sim_model_forward(x, w1, b1, w2, b2, w3)
    out = jax.block_until_ready(out)

    # Pure-JAX reference of the PyTorch forward (same explicit f32 matmul precision).
    hi = jax.lax.Precision.HIGHEST
    h1 = jnp.maximum(x @ w1.T + b1, 0.0)
    h2 = jnp.maximum(jnp.dot(h1, w2.T, precision=hi) + b2, 0.0)
    ref = jnp.dot(h2, w3.T, precision=hi)

    assert out.shape == (N, 1)
    assert jnp.allclose(out, ref, atol=1e-4, rtol=1e-4), "mismatch vs reference"

    print("KERNEL_OK")
</pallas_src>

<mosaic_0001>
module attributes {stable_mosaic.version = 11 : i64} {
  func.func @mlp_kernel(%arg0: i32, %arg1: memref<1x256xf32, #tpu.memory_space<vmem>>, %arg2: memref<128x3xf32, #tpu.memory_space<vmem>>, %arg3: memref<128x128xf32, #tpu.memory_space<vmem>>, %arg4: memref<1x128xf32, #tpu.memory_space<vmem>>, %arg5: memref<1x256xf32, #tpu.memory_space<vmem>>) attributes {dimension_semantics = [#tpu.dimension_semantics<parallel>], iteration_bounds = array<i64: 1>, scalar_prefetch = 0 : i64, scratch_operands = 0 : i64, tpu.core_type = #tpu.core_type<tc>, window_params = [{transform_indices = @transform_0, window_bounds = array<i64: 1, 256>}, {pipeline_mode = #tpu.pipeline_mode<synchronous>, transform_indices = @transform_1, window_bounds = array<i64: 128, 3>}, {pipeline_mode = #tpu.pipeline_mode<synchronous>, transform_indices = @transform_2, window_bounds = array<i64: 128, 128>}, {pipeline_mode = #tpu.pipeline_mode<synchronous>, transform_indices = @transform_3, window_bounds = array<i64: 1, 128>}, {transform_indices = @transform_4, window_bounds = array<i64: 1, 256>}]} {
    %c0 = arith.constant 0 : index
    %c0_0 = arith.constant 0 : index
    %0 = vector.load %arg1[%c0, %c0_0] : memref<1x256xf32, #tpu.memory_space<vmem>>, vector<1x256xf32>
    %c0_1 = arith.constant 0 : index
    %c0_2 = arith.constant 0 : index
    %1 = vector.load %arg2[%c0_1, %c0_2] : memref<128x3xf32, #tpu.memory_space<vmem>>, vector<128x1xf32>
    %c0_3 = arith.constant 0 : index
    %c1 = arith.constant 1 : index
    %2 = vector.load %arg2[%c0_3, %c1] : memref<128x3xf32, #tpu.memory_space<vmem>>, vector<128x1xf32>
    %c0_4 = arith.constant 0 : index
    %c2 = arith.constant 2 : index
    %3 = vector.load %arg2[%c0_4, %c2] : memref<128x3xf32, #tpu.memory_space<vmem>>, vector<128x1xf32>
    %4 = vector.broadcast %1 : vector<128x1xf32> to vector<128x256xf32>
    %5 = vector.broadcast %0 : vector<1x256xf32> to vector<128x256xf32>
    %6 = arith.mulf %4, %5 : vector<128x256xf32>
    %7 = vector.broadcast %2 : vector<128x1xf32> to vector<128x256xf32>
    %8 = arith.addf %6, %7 : vector<128x256xf32>
    %cst = arith.constant 0.000000e+00 : f32
    %9 = vector.broadcast %cst : f32 to vector<128x256xf32>
    %10 = arith.maximumf %8, %9 : vector<128x256xf32>
    %c0_5 = arith.constant 0 : index
    %c0_6 = arith.constant 0 : index
    %11 = vector.load %arg3[%c0_5, %c0_6] : memref<128x128xf32, #tpu.memory_space<vmem>>, vector<128x128xf32>
    %cst_7 = arith.constant dense<0.000000e+00> : vector<128x256xf32>
    %12 = tpu.matmul %11, %10, %cst_7 {dimension_numbers = #tpu.dot_dimension_numbers<[1], [0], [0], [1], [0, 0, 1, 1], [], []>, precision = #tpu.contract_precision<fp32>} : vector<128x128xf32>, vector<128x256xf32>, vector<128x256xf32> -> vector<128x256xf32>
    %13 = vector.broadcast %3 : vector<128x1xf32> to vector<128x256xf32>
    %14 = arith.addf %12, %13 : vector<128x256xf32>
    %cst_8 = arith.constant 0.000000e+00 : f32
    %15 = vector.broadcast %cst_8 : f32 to vector<128x256xf32>
    %16 = arith.maximumf %14, %15 : vector<128x256xf32>
    %c0_9 = arith.constant 0 : index
    %c0_10 = arith.constant 0 : index
    %17 = vector.load %arg4[%c0_9, %c0_10] : memref<1x128xf32, #tpu.memory_space<vmem>>, vector<1x128xf32>
    %cst_11 = arith.constant dense<0.000000e+00> : vector<1x256xf32>
    %18 = tpu.matmul %17, %16, %cst_11 {dimension_numbers = #tpu.dot_dimension_numbers<[1], [0], [0], [1], [0, 0, 1, 1], [], []>, precision = #tpu.contract_precision<fp32>} : vector<1x128xf32>, vector<128x256xf32>, vector<1x256xf32> -> vector<1x256xf32>
    %c0_12 = arith.constant 0 : index
    %c0_13 = arith.constant 0 : index
    %19 = vector.load %arg5[%c0_12, %c0_13] : memref<1x256xf32, #tpu.memory_space<vmem>>, vector<1x256xf32>
    tpu.vector_store %arg5[%c0_12, %c0_13], %18 {strides = array<i32>} : memref<1x256xf32, #tpu.memory_space<vmem>>, vector<1x256xf32>,
    return
  }
  func.func @transform_0(%arg0: i32) -> (i32, i32) {
    %c0_i32 = arith.constant 0 : i32
    %c0_i32_0 = arith.constant 0 : i32
    return %c0_i32, %arg0 : i32, i32
  }
  func.func @transform_1(%arg0: i32) -> (i32, i32) {
    %c0_i32 = arith.constant 0 : i32
    %c0_i32_0 = arith.constant 0 : i32
    %c0_i32_1 = arith.constant 0 : i32
    return %c0_i32, %c0_i32_0 : i32, i32
  }
  func.func @transform_2(%arg0: i32) -> (i32, i32) {
    %c0_i32 = arith.constant 0 : i32
    %c0_i32_0 = arith.constant 0 : i32
    %c0_i32_1 = arith.constant 0 : i32
    return %c0_i32, %c0_i32_0 : i32, i32
  }
  func.func @transform_3(%arg0: i32) -> (i32, i32) {
    %c0_i32 = arith.constant 0 : i32
    %c0_i32_0 = arith.constant 0 : i32
    %c0_i32_1 = arith.constant 0 : i32
    return %c0_i32, %c0_i32_0 : i32, i32
  }
  func.func @transform_4(%arg0: i32) -> (i32, i32) {
    %c0_i32 = arith.constant 0 : i32
    %c0_i32_0 = arith.constant 0 : i32
    return %c0_i32, %arg0 : i32, i32
  }
}

</mosaic_0001>

<llo_original>
// kernel: tpu_custom_call.1
$region0: #{tpu_custom_call.1}
  #allocation0 [shape = 'u32[]', space=smem, size = 0x4, offset = 0x4, fixed_abs, tag = 'smem constant byte address 0x4 - core index']
  #allocation1 [shape = 'u32[72,128]{1,0:T(1,128)}', space=vmem, size = 0x9000, scoped, tag = 'internal scratch']
  %s0 = inlined_call_operand.vmem [shape: f32[1,256], index: 0, kind: input, shape index: {}]
  %s1 = inlined_call_operand.vmem [shape: f32[128,3], index: 1, kind: input, shape index: {}]
  %s2 = inlined_call_operand.vmem [shape: f32[128,128], index: 2, kind: input, shape index: {}]
  %s3 = inlined_call_operand.vmem [shape: f32[1,128], index: 3, kind: input, shape index: {}]
  %s4 = inlined_call_operand.hbm [shape: f32[1,256], index: 4, kind: output, shape index: {}]
  %s5 = sld [smem:[#allocation0]]
  $region26: #{tpu_custom_call.1} parent=0
    _
  %s7 = ssub.s32 1, %s5
  %s8 = scalar_select 0, %s7, %s5
  $region1: #{tpu_custom_call.1} parent=0
    #allocation2 [shape = 'u8[1024]{0}', space=vmem, size = 0x400, scoped, tag = 'output window, operand 0, single buffered']
    #allocation3 [shape = 's32[1]{0}', space=sflag, size = 0x4, scoped, tag = 'scoped memory for tpu_custom_call.1']
    %9 = vsyncpa [#allocation3], 0
    // Predicated region
    $region2: #{tpu_custom_call.1} parent=1 // pred_check
      _
    $region3: #{tpu_custom_call.1} parent=1 // pred_check_branch
      %11 = sbr.rel (0) target = $region5
    $region4: #{tpu_custom_call.1} parent=1 // pred_region
      _
    $region5: #{tpu_custom_call.1} parent=1 // pred_fallthru
      _
    // Predicated region
    $region6: #{tpu_custom_call.1} parent=1 // pred_check
      _
    $region7: #{tpu_custom_call.1} parent=1 // pred_check_branch
      %13 = sbr.rel (0) target = $region9
    $region8: #{tpu_custom_call.1} parent=1 // pred_region
      _
    $region9: #{tpu_custom_call.1} parent=1 // pred_fallthru
      _
    // Predicated region
    $region10: #{tpu_custom_call.1} parent=1 // pred_check
      _
    $region11: #{tpu_custom_call.1} parent=1 // pred_check_branch
      %15 = sbr.rel (0) target = $region13
    $region12: #{tpu_custom_call.1} parent=1 // pred_region
      _
    $region13: #{tpu_custom_call.1} parent=1 // pred_fallthru
      _
    // Predicated region
    $region14: #{tpu_custom_call.1} parent=1 // pred_check
      _
    $region15: #{tpu_custom_call.1} parent=1 // pred_check_branch
      %17 = sbr.rel (0) target = $region17
    $region16: #{tpu_custom_call.1} parent=1 // pred_region
      _
    $region17: #{tpu_custom_call.1} parent=1 // pred_fallthru
      _
    %v18 = vld [vmem:[%s0] sm:$0x3]
    %v19 = vld [vmem:[%s1] sm:$0xff]
    %v20 = vld [vmem:[%s1 + $0x8] sm:$0xff]
    %v21 = vld [vmem:[%s1 + $0x10] sm:$0xff]
    %v22 = vld [vmem:[%s1 + $0x18] sm:$0xff]
    %v23 = vld [vmem:[%s1 + $0x20] sm:$0xff]
    %v24 = vld [vmem:[%s1 + $0x28] sm:$0xff]
    %v25 = vld [vmem:[%s1 + $0x30] sm:$0xff]
    %v26 = vld [vmem:[%s1 + $0x38] sm:$0xff]
    %v27 = vld [vmem:[%s1 + $0x40] sm:$0xff]
    %v28 = vld [vmem:[%s1 + $0x48] sm:$0xff]
    %v29 = vld [vmem:[%s1 + $0x50] sm:$0xff]
    %v30 = vld [vmem:[%s1 + $0x58] sm:$0xff]
    %v31 = vld [vmem:[%s1 + $0x60] sm:$0xff]
    %v32 = vld [vmem:[%s1 + $0x68] sm:$0xff]
    %v33 = vld [vmem:[%s1 + $0x70] sm:$0xff]
    %v34 = vld [vmem:[%s1 + $0x78] sm:$0xff]
    %36 = vset.pattern.permute.xlu0 0
    %37 = vperm.xlu0 %36, %v19
    %v38 = vpop.permute.xlu0 %37
    %41 = vset.pattern.permute.xlu0 0
    %42 = vperm.xlu0 %41, %v20
    %v43 = vpop.permute.xlu0 %42
    %46 = vset.pattern.permute.xlu0 0
    %47 = vperm.xlu0 %46, %v21
    %v48 = vpop.permute.xlu0 %47
    %51 = vset.pattern.permute.xlu0 0
    %52 = vperm.xlu0 %51, %v22
    %v53 = vpop.permute.xlu0 %52
    %56 = vset.pattern.permute.xlu0 0
    %57 = vperm.xlu0 %56, %v23
    %v58 = vpop.permute.xlu0 %57
    %61 = vset.pattern.permute.xlu0 0
    %62 = vperm.xlu0 %61, %v24
    %v63 = vpop.permute.xlu0 %62
    %66 = vset.pattern.permute.xlu0 0
    %67 = vperm.xlu0 %66, %v25
    %v68 = vpop.permute.xlu0 %67
    %71 = vset.pattern.permute.xlu0 0
    %72 = vperm.xlu0 %71, %v26
    %v73 = vpop.permute.xlu0 %72
    %76 = vset.pattern.permute.xlu0 0
    %77 = vperm.xlu0 %76, %v27
    %v78 = vpop.permute.xlu0 %77
    %81 = vset.pattern.permute.xlu0 0
    %82 = vperm.xlu0 %81, %v28
    %v83 = vpop.permute.xlu0 %82
    %86 = vset.pattern.permute.xlu0 0
    %87 = vperm.xlu0 %86, %v29
    %v88 = vpop.permute.xlu0 %87
    %91 = vset.pattern.permute.xlu0 0
    %92 = vperm.xlu0 %91, %v30
    %v93 = vpop.permute.xlu0 %92
    %96 = vset.pattern.permute.xlu0 0
    %97 = vperm.xlu0 %96, %v31
    %v98 = vpop.permute.xlu0 %97
    %101 = vset.pattern.permute.xlu0 0
    %102 = vperm.xlu0 %101, %v32
    %v103 = vpop.permute.xlu0 %102
    %106 = vset.pattern.permute.xlu0 0
    %107 = vperm.xlu0 %106, %v33
    %v108 = vpop.permute.xlu0 %107
    %111 = vset.pattern.permute.xlu0 0
    %112 = vperm.xlu0 %111, %v34
    %v113 = vpop.permute.xlu0 %112
    %v116 = vperm.slane %v18, 0
    %v117 = vperm.slane %v18, 1
    %v120 = vmul.f32 %v38, %v116
    %v121 = vmul.f32 %v38, %v117
    %v122 = vmul.f32 %v43, %v116
    %v123 = vmul.f32 %v43, %v117
    %v124 = vmul.f32 %v48, %v116
    %v125 = vmul.f32 %v48, %v117
    %v126 = vmul.f32 %v53, %v116
    %v127 = vmul.f32 %v53, %v117
    %v128 = vmul.f32 %v58, %v116
    %v129 = vmul.f32 %v58, %v117
    %v130 = vmul.f32 %v63, %v116
    %v131 = vmul.f32 %v63, %v117
    %v132 = vmul.f32 %v68, %v116
    %v133 = vmul.f32 %v68, %v117
    %v134 = vmul.f32 %v73, %v116
    %v135 = vmul.f32 %v73, %v117
    %v136 = vmul.f32 %v78, %v116
    %v137 = vmul.f32 %v78, %v117
    %v138 = vmul.f32 %v83, %v116
    %v139 = vmul.f32 %v83, %v117
    %v140 = vmul.f32 %v88, %v116
    %v141 = vmul.f32 %v88, %v117
    %v142 = vmul.f32 %v93, %v116
    %v143 = vmul.f32 %v93, %v117
    %v144 = vmul.f32 %v98, %v116
    %v145 = vmul.f32 %v98, %v117
    %v146 = vmul.f32 %v103, %v116
    %v147 = vmul.f32 %v103, %v117
    %v148 = vmul.f32 %v108, %v116
    %v149 = vmul.f32 %v108, %v117
    %v150 = vmul.f32 %v113, %v116
    %v151 = vmul.f32 %v113, %v117
    %152 = vset.pattern.permute.xlu0 1
    %153 = vperm.xlu0 %152, %v19
    %v154 = vpop.permute.xlu0 %153
    %156 = vset.pattern.permute.xlu0 1
    %157 = vperm.xlu0 %156, %v20
    %v158 = vpop.permute.xlu0 %157
    %160 = vset.pattern.permute.xlu0 1
    %161 = vperm.xlu0 %160, %v21
    %v162 = vpop.permute.xlu0 %161
    %164 = vset.pattern.permute.xlu0 1
    %165 = vperm.xlu0 %164, %v22
    %v166 = vpop.permute.xlu0 %165
    %168 = vset.pattern.permute.xlu0 1
    %169 = vperm.xlu0 %168, %v23
    %v170 = vpop.permute.xlu0 %169
    %172 = vset.pattern.permute.xlu0 1
    %173 = vperm.xlu0 %172, %v24
    %v174 = vpop.permute.xlu0 %173
    %176 = vset.pattern.permute.xlu0 1
    %177 = vperm.xlu0 %176, %v25
    %v178 = vpop.permute.xlu0 %177
    %180 = vset.pattern.permute.xlu0 1
    %181 = vperm.xlu0 %180, %v26
    %v182 = vpop.permute.xlu0 %181
    %184 = vset.pattern.permute.xlu0 1
    %185 = vperm.xlu0 %184, %v27
    %v186 = vpop.permute.xlu0 %185
    %188 = vset.pattern.permute.xlu0 1
    %189 = vperm.xlu0 %188, %v28
    %v190 = vpop.permute.xlu0 %189
    %192 = vset.pattern.permute.xlu0 1
    %193 = vperm.xlu0 %192, %v29
    %v194 = vpop.permute.xlu0 %193
    %196 = vset.pattern.permute.xlu0 1
    %197 = vperm.xlu0 %196, %v30
    %v198 = vpop.permute.xlu0 %197
    %200 = vset.pattern.permute.xlu0 1
    %201 = vperm.xlu0 %200, %v31
    %v202 = vpop.permute.xlu0 %201
    %204 = vset.pattern.permute.xlu0 1
    %205 = vperm.xlu0 %204, %v32
    %v206 = vpop.permute.xlu0 %205
    %208 = vset.pattern.permute.xlu0 1
    %209 = vperm.xlu0 %208, %v33
    %v210 = vpop.permute.xlu0 %209
    %212 = vset.pattern.permute.xlu0 1
    %213 = vperm.xlu0 %212, %v34
    %v214 = vpop.permute.xlu0 %213
    %v216 = vadd.f32 %v120, %v154
    %v217 = vadd.f32 %v121, %v154
    %v218 = vadd.f32 %v122, %v158
    %v219 = vadd.f32 %v123, %v158
    %v220 = vadd.f32 %v124, %v162
    %v221 = vadd.f32 %v125, %v162
    %v222 = vadd.f32 %v126, %v166
    %v223 = vadd.f32 %v127, %v166
    %v224 = vadd.f32 %v128, %v170
    %v225 = vadd.f32 %v129, %v170
    %v226 = vadd.f32 %v130, %v174
    %v227 = vadd.f32 %v131, %v174
    %v228 = vadd.f32 %v132, %v178
    %v229 = vadd.f32 %v133, %v178
    %v230 = vadd.f32 %v134, %v182
    %v231 = vadd.f32 %v135, %v182
    %v232 = vadd.f32 %v136, %v186
    %v233 = vadd.f32 %v137, %v186
    %v234 = vadd.f32 %v138, %v190
    %v235 = vadd.f32 %v139, %v190
    %v236 = vadd.f32 %v140, %v194
    %v237 = vadd.f32 %v141, %v194
    %v238 = vadd.f32 %v142, %v198
    %v239 = vadd.f32 %v143, %v198
    %v240 = vadd.f32 %v144, %v202
    %v241 = vadd.f32 %v145, %v202
    %v242 = vadd.f32 %v146, %v206
    %v243 = vadd.f32 %v147, %v206
    %v244 = vadd.f32 %v148, %v210
    %v245 = vadd.f32 %v149, %v210
    %v246 = vadd.f32 %v150, %v214
    %v247 = vadd.f32 %v151, %v214
    %v248 = vmax.f32 %v216, 0.0
    %v249 = vmax.f32 %v217, 0.0
    %v250 = vmax.f32 %v218, 0.0
    %v251 = vmax.f32 %v219, 0.0
    %v252 = vmax.f32 %v220, 0.0
    %v253 = vmax.f32 %v221, 0.0
    %v254 = vmax.f32 %v222, 0.0
    %v255 = vmax.f32 %v223, 0.0
    %v256 = vmax.f32 %v224, 0.0
    %v257 = vmax.f32 %v225, 0.0
    %v258 = vmax.f32 %v226, 0.0
    %v259 = vmax.f32 %v227, 0.0
    %v260 = vmax.f32 %v228, 0.0
    %v261 = vmax.f32 %v229, 0.0
    %v262 = vmax.f32 %v230, 0.0
    %v263 = vmax.f32 %v231, 0.0
    %v264 = vmax.f32 %v232, 0.0
    %v265 = vmax.f32 %v233, 0.0
    %v266 = vmax.f32 %v234, 0.0
    %v267 = vmax.f32 %v235, 0.0
    %v268 = vmax.f32 %v236, 0.0
    %v269 = vmax.f32 %v237, 0.0
    %v270 = vmax.f32 %v238, 0.0
    %v271 = vmax.f32 %v239, 0.0
    %v272 = vmax.f32 %v240, 0.0
    %v273 = vmax.f32 %v241, 0.0
    %v274 = vmax.f32 %v242, 0.0
    %v275 = vmax.f32 %v243, 0.0
    %v276 = vmax.f32 %v244, 0.0
    %v277 = vmax.f32 %v245, 0.0
    %v278 = vmax.f32 %v246, 0.0
    %v279 = vmax.f32 %v247, 0.0
    %v280 = vld [vmem:[%s2] sm:$0xff]
    %v281 = vld [vmem:[%s2 + $0x8] sm:$0xff]
    %v282 = vld [vmem:[%s2 + $0x10] sm:$0xff]
    %v283 = vld [vmem:[%s2 + $0x18] sm:$0xff]
    %v284 = vld [vmem:[%s2 + $0x20] sm:$0xff]
    %v285 = vld [vmem:[%s2 + $0x28] sm:$0xff]
    %v286 = vld [vmem:[%s2 + $0x30] sm:$0xff]
    %v287 = vld [vmem:[%s2 + $0x38] sm:$0xff]
    %v288 = vld [vmem:[%s2 + $0x40] sm:$0xff]
    %v289 = vld [vmem:[%s2 + $0x48] sm:$0xff]
    %v290 = vld [vmem:[%s2 + $0x50] sm:$0xff]
    %v291 = vld [vmem:[%s2 + $0x58] sm:$0xff]
    %v292 = vld [vmem:[%s2 + $0x60] sm:$0xff]
    %v293 = vld [vmem:[%s2 + $0x68] sm:$0xff]
    %v294 = vld [vmem:[%s2 + $0x70] sm:$0xff]
    %v295 = vld [vmem:[%s2 + $0x78] sm:$0xff]
    %296 = vset.pattern.permute.xlu0 2
    %297 = vperm.xlu0 %296, %v19
    %v298 = vpop.permute.xlu0 %297
    %300 = vset.pattern.permute.xlu0 2
    %301 = vperm.xlu0 %300, %v20
    %v302 = vpop.permute.xlu0 %301
    %304 = vset.pattern.permute.xlu0 2
    %305 = vperm.xlu0 %304, %v21
    %v306 = vpop.permute.xlu0 %305
    %308 = vset.pattern.permute.xlu0 2
    %309 = vperm.xlu0 %308, %v22
    %v310 = vpop.permute.xlu0 %309
    %312 = vset.pattern.permute.xlu0 2
    %313 = vperm.xlu0 %312, %v23
    %v314 = vpop.permute.xlu0 %313
    %316 = vset.pattern.permute.xlu0 2
    %317 = vperm.xlu0 %316, %v24
    %v318 = vpop.permute.xlu0 %317
    %320 = vset.pattern.permute.xlu0 2
    %321 = vperm.xlu0 %320, %v25
    %v322 = vpop.permute.xlu0 %321
    %324 = vset.pattern.permute.xlu0 2
    %325 = vperm.xlu0 %324, %v26
    %v326 = vpop.permute.xlu0 %325
    %328 = vset.pattern.permute.xlu0 2
    %329 = vperm.xlu0 %328, %v27
    %v330 = vpop.permute.xlu0 %329
    %332 = vset.pattern.permute.xlu0 2
    %333 = vperm.xlu0 %332, %v28
    %v334 = vpop.permute.xlu0 %333
    %336 = vset.pattern.permute.xlu0 2
    %337 = vperm.xlu0 %336, %v29
    %v338 = vpop.permute.xlu0 %337
    %340 = vset.pattern.permute.xlu0 2
    %341 = vperm.xlu0 %340, %v30
    %v342 = vpop.permute.xlu0 %341
    %344 = vset.pattern.permute.xlu0 2
    %345 = vperm.xlu0 %344, %v31
    %v346 = vpop.permute.xlu0 %345
    %348 = vset.pattern.permute.xlu0 2
    %349 = vperm.xlu0 %348, %v32
    %v350 = vpop.permute.xlu0 %349
    %352 = vset.pattern.permute.xlu0 2
    %353 = vperm.xlu0 %352, %v33
    %v354 = vpop.permute.xlu0 %353
    %356 = vset.pattern.permute.xlu0 2
    %357 = vperm.xlu0 %356, %v34
    %v358 = vpop.permute.xlu0 %357
    %v360 = vand.u32 %v278, 4294901760
    %361 = vmatpush.msra.mxu0 %v360
    %v362 = vand.u32 %v276, 4294901760
    %363 = vmatpush.msra.mxu0 %v362
    %v364 = vand.u32 %v274, 4294901760
    %365 = vmatpush.msra.mxu0 %v364
    %v366 = vand.u32 %v272, 4294901760
    %367 = vmatpush.msra.mxu0 %v366
    %v368 = vand.u32 %v270, 4294901760
    %369 = vmatpush.msra.mxu0 %v368
    %v370 = vand.u32 %v268, 4294901760
    %371 = vmatpush.msra.mxu0 %v370
    %v372 = vand.u32 %v266, 4294901760
    %373 = vmatpush.msra.mxu0 %v372
    %v374 = vand.u32 %v264, 4294901760
    %375 = vmatpush.msra.mxu0 %v374
    %v376 = vand.u32 %v262, 4294901760
    %377 = vmatpush.msra.mxu0 %v376
    %v378 = vand.u32 %v260, 4294901760
    %379 = vmatpush.msra.mxu0 %v378
    %v380 = vand.u32 %v258, 4294901760
    %381 = vmatpush.msra.mxu0 %v380
    %v382 = vand.u32 %v256, 4294901760
    %383 = vmatpush.msra.mxu0 %v382
    %v384 = vand.u32 %v254, 4294901760
    %385 = vmatpush.msra.mxu0 %v384
    %v386 = vand.u32 %v252, 4294901760
    %387 = vmatpush.msra.mxu0 %v386
    %v388 = vand.u32 %v250, 4294901760
    %389 = vmatpush.msra.mxu0 %v388
    %v390 = vand.u32 %v248, 4294901760
    %391 = vmatpush.msra.mxu0 %v390
    %v392 = vand.u32 %v280, 4294901760
    %v393 = vsub.f32 %v280, %v392
    %v394 = vand.u32 %v393, 4294901760
    %v395 = vsub.f32 %v393, %v394
    %v396 = vand.u32 %v395, 4294901760
    %397 = vmatmul.f32.gmra.mxu0 %v396
    %v398 = vpop.f32.mrf.mxu0
    %v399 = vadd.f32 %v298, %v398
    %v400 = vand.u32 %v281, 4294901760
    %v401 = vsub.f32 %v281, %v400
    %v402 = vand.u32 %v401, 4294901760
    %v403 = vsub.f32 %v401, %v402
    %v404 = vand.u32 %v403, 4294901760
    %405 = vmatmul.f32.gmra.mxu0 %v404
    %v406 = vpop.f32.mrf.mxu0
    %v407 = vadd.f32 %v302, %v406
    %v408 = vand.u32 %v282, 4294901760
    %v409 = vsub.f32 %v282, %v408
    %v410 = vand.u32 %v409, 4294901760
    %v411 = vsub.f32 %v409, %v410
    %v412 = vand.u32 %v411, 4294901760
    %413 = vmatmul.f32.gmra.mxu0 %v412
    %v414 = vpop.f32.mrf.mxu0
    %v415 = vadd.f32 %v306, %v414
    %v416 = vand.u32 %v283, 4294901760
    %v417 = vsub.f32 %v283, %v416
    %v418 = vand.u32 %v417, 4294901760
    %v419 = vsub.f32 %v417, %v418
    %v420 = vand.u32 %v419, 4294901760
    %421 = vmatmul.f32.gmra.mxu0 %v420
    %v422 = vpop.f32.mrf.mxu0
    %v423 = vadd.f32 %v310, %v422
    %v424 = vand.u32 %v284, 4294901760
    %v425 = vsub.f32 %v284, %v424
    %v426 = vand.u32 %v425, 4294901760
    %v427 = vsub.f32 %v425, %v426
    %v428 = vand.u32 %v427, 4294901760
    %429 = vmatmul.f32.gmra.mxu0 %v428
    %v430 = vpop.f32.mrf.mxu0
    %v431 = vadd.f32 %v314, %v430
    %v432 = vand.u32 %v285, 4294901760
    %v433 = vsub.f32 %v285, %v432
    %v434 = vand.u32 %v433, 4294901760
    %v435 = vsub.f32 %v433, %v434
    %v436 = vand.u32 %v435, 4294901760
    %437 = vmatmul.f32.gmra.mxu0 %v436
    %v438 = vpop.f32.mrf.mxu0
    %v439 = vadd.f32 %v318, %v438
    %v440 = vand.u32 %v286, 4294901760
    %v441 = vsub.f32 %v286, %v440
    %v442 = vand.u32 %v441, 4294901760
    %v443 = vsub.f32 %v441, %v442
    %v444 = vand.u32 %v443, 4294901760
    %445 = vmatmul.f32.gmra.mxu0 %v444
    %v446 = vpop.f32.mrf.mxu0
    %v447 = vadd.f32 %v322, %v446
    %v448 = vand.u32 %v287, 4294901760
    %v449 = vsub.f32 %v287, %v448
    %v450 = vand.u32 %v449, 4294901760
    %v451 = vsub.f32 %v449, %v450
    %v452 = vand.u32 %v451, 4294901760
    %453 = vmatmul.f32.gmra.mxu0 %v452
    %v454 = vpop.f32.mrf.mxu0
    %v455 = vadd.f32 %v326, %v454
    %v456 = vand.u32 %v288, 4294901760
    %v457 = vsub.f32 %v288, %v456
    %v458 = vand.u32 %v457, 4294901760
    %v459 = vsub.f32 %v457, %v458
    %v460 = vand.u32 %v459, 4294901760
    %461 = vmatmul.f32.gmra.mxu0 %v460
    %v462 = vpop.f32.mrf.mxu0
    %v463 = vadd.f32 %v330, %v462
    %v464 = vand.u32 %v289, 4294901760
    %v465 = vsub.f32 %v289, %v464
    %v466 = vand.u32 %v465, 4294901760
    %v467 = vsub.f32 %v465, %v466
    %v468 = vand.u32 %v467, 4294901760
    %469 = vmatmul.f32.gmra.mxu0 %v468
    %v470 = vpop.f32.mrf.mxu0
    %v471 = vadd.f32 %v334, %v470
    %v472 = vand.u32 %v290, 4294901760
    %v473 = vsub.f32 %v290, %v472
    %v474 = vand.u32 %v473, 4294901760
    %v475 = vsub.f32 %v473, %v474
    %v476 = vand.u32 %v475, 4294901760
    %477 = vmatmul.f32.gmra.mxu0 %v476
    %v478 = vpop.f32.mrf.mxu0
    %v479 = vadd.f32 %v338, %v478
    %v480 = vand.u32 %v291, 4294901760
    %v481 = vsub.f32 %v291, %v480
    %v482 = vand.u32 %v481, 4294901760
    %v483 = vsub.f32 %v481, %v482
    %v484 = vand.u32 %v483, 4294901760
    %485 = vmatmul.f32.gmra.mxu0 %v484
    %v486 = vpop.f32.mrf.mxu0
    %v487 = vadd.f32 %v342, %v486
    %v488 = vand.u32 %v292, 4294901760
    %v489 = vsub.f32 %v292, %v488
    %v490 = vand.u32 %v489, 4294901760
    %v491 = vsub.f32 %v489, %v490
    %v492 = vand.u32 %v491, 4294901760
    %493 = vmatmul.f32.gmra.mxu0 %v492
    %v494 = vpop.f32.mrf.mxu0
    %v495 = vadd.f32 %v346, %v494
    %v496 = vand.u32 %v293, 4294901760
    %v497 = vsub.f32 %v293, %v496
    %v498 = vand.u32 %v497, 4294901760
    %v499 = vsub.f32 %v497, %v498
    %v500 = vand.u32 %v499, 4294901760
    %501 = vmatmul.f32.gmra.mxu0 %v500
    %v502 = vpop.f32.mrf.mxu0
    %v503 = vadd.f32 %v350, %v502
    %v504 = vand.u32 %v294, 4294901760
    %v505 = vsub.f32 %v294, %v504
    %v506 = vand.u32 %v505, 4294901760
    %v507 = vsub.f32 %v505, %v506
    %v508 = vand.u32 %v507, 4294901760
    %509 = vmatmul.f32.gmra.mxu0 %v508
    %v510 = vpop.f32.mrf.mxu0
    %v511 = vadd.f32 %v354, %v510
    %v512 = vand.u32 %v295, 4294901760
    %v513 = vsub.f32 %v295, %v512
    %v514 = vand.u32 %v513, 4294901760
    %v515 = vsub.f32 %v513, %v514
    %v516 = vand.u32 %v515, 4294901760
    %517 = vmatmul.f32.gmra.mxu0 %v516
    %v518 = vpop.f32.mrf.mxu0
    %v519 = vadd.f32 %v358, %v518
    %520 = vdwg.mxu0
    %v521 = vand.u32 %v278, 4294901760
    %v522 = vsub.f32 %v278, %v521
    %v523 = vand.u32 %v522, 4294901760
    %v524 = vsub.f32 %v522, %v523
    %v525 = vand.u32 %v524, 4294901760
    %526 = vmatpush.msra.mxu0 %v525
    %v527 = vand.u32 %v276, 4294901760
    %v528 = vsub.f32 %v276, %v527
    %v529 = vand.u32 %v528, 4294901760
    %v530 = vsub.f32 %v528, %v529
    %v531 = vand.u32 %v530, 4294901760
    %532 = vmatpush.msra.mxu0 %v531
    %v533 = vand.u32 %v274, 4294901760
    %v534 = vsub.f32 %v274, %v533
    %v535 = vand.u32 %v534, 4294901760
    %v536 = vsub.f32 %v534, %v535
    %v537 = vand.u32 %v536, 4294901760
    %538 = vmatpush.msra.mxu0 %v537
    %v539 = vand.u32 %v272, 4294901760
    %v540 = vsub.f32 %v272, %v539
    %v541 = vand.u32 %v540, 4294901760
    %v542 = vsub.f32 %v540, %v541
    %v543 = vand.u32 %v542, 4294901760
    %544 = vmatpush.msra.mxu0 %v543
    %v545 = vand.u32 %v270, 4294901760
    %v546 = vsub.f32 %v270, %v545
    %v547 = vand.u32 %v546, 4294901760
    %v548 = vsub.f32 %v546, %v547
    %v549 = vand.u32 %v548, 4294901760
    %550 = vmatpush.msra.mxu0 %v549
    %v551 = vand.u32 %v268, 4294901760
    %v552 = vsub.f32 %v268, %v551
    %v553 = vand.u32 %v552, 4294901760
    %v554 = vsub.f32 %v552, %v553
    %v555 = vand.u32 %v554, 4294901760
    %556 = vmatpush.msra.mxu0 %v555
    %v557 = vand.u32 %v266, 4294901760
    %v558 = vsub.f32 %v266, %v557
    %v559 = vand.u32 %v558, 4294901760
    %v560 = vsub.f32 %v558, %v559
    %v561 = vand.u32 %v560, 4294901760
    %562 = vmatpush.msra.mxu0 %v561
    %v563 = vand.u32 %v264, 4294901760
    %v564 = vsub.f32 %v264, %v563
    %v565 = vand.u32 %v564, 4294901760
    %v566 = vsub.f32 %v564, %v565
    %v567 = vand.u32 %v566, 4294901760
    %568 = vmatpush.msra.mxu0 %v567
    %v569 = vand.u32 %v262, 4294901760
    %v570 = vsub.f32 %v262, %v569
    %v571 = vand.u32 %v570, 4294901760
    %v572 = vsub.f32 %v570, %v571
    %v573 = vand.u32 %v572, 4294901760
    %574 = vmatpush.msra.mxu0 %v573
    %v575 = vand.u32 %v260, 4294901760
    %v576 = vsub.f32 %v260, %v575
    %v577 = vand.u32 %v576, 4294901760
    %v578 = vsub.f32 %v576, %v577
    %v579 = vand.u32 %v578, 4294901760
    %580 = vmatpush.msra.mxu0 %v579
    %v581 = vand.u32 %v258, 4294901760
    %v582 = vsub.f32 %v258, %v581
    %v583 = vand.u32 %v582, 4294901760
    %v584 = vsub.f32 %v582, %v583
    %v585 = vand.u32 %v584, 4294901760
    %586 = vmatpush.msra.mxu0 %v585
    %v587 = vand.u32 %v256, 4294901760
    %v588 = vsub.f32 %v256, %v587
    %v589 = vand.u32 %v588, 4294901760
    %v590 = vsub.f32 %v588, %v589
    %v591 = vand.u32 %v590, 4294901760
    %592 = vmatpush.msra.mxu0 %v591
    %v593 = vand.u32 %v254, 4294901760
    %v594 = vsub.f32 %v254, %v593
    %v595 = vand.u32 %v594, 4294901760
    %v596 = vsub.f32 %v594, %v595
    %v597 = vand.u32 %v596, 4294901760
    %598 = vmatpush.msra.mxu0 %v597
    %v599 = vand.u32 %v252, 4294901760
    %v600 = vsub.f32 %v252, %v599
    %v601 = vand.u32 %v600, 4294901760
    %v602 = vsub.f32 %v600, %v601
    %v603 = vand.u32 %v602, 4294901760
    %604 = vmatpush.msra.mxu0 %v603
    %v605 = vand.u32 %v250, 4294901760
    %v606 = vsub.f32 %v250, %v605
    %v607 = vand.u32 %v606, 4294901760
    %v608 = vsub.f32 %v606, %v607
    %v609 = vand.u32 %v608, 4294901760
    %610 = vmatpush.msra.mxu0 %v609
    %v611 = vand.u32 %v248, 4294901760
    %v612 = vsub.f32 %v248, %v611
    %v613 = vand.u32 %v612, 4294901760
    %v614 = vsub.f32 %v612, %v613
    %v615 = vand.u32 %v614, 4294901760
    %616 = vmatpush.msra.mxu0 %v615
    %v617 = vand.u32 %v280, 4294901760
    %618 = vmatmul.f32.gmra.mxu0 %v617
    %v619 = vpop.f32.mrf.mxu0
    %v620 = vadd.f32 %v399, %v619
    %v621 = vand.u32 %v281, 4294901760
    %622 = vmatmul.f32.gmra.mxu0 %v621
    %v623 = vpop.f32.mrf.mxu0
    %v624 = vadd.f32 %v407, %v623
    %v625 = vand.u32 %v282, 4294901760
    %626 = vmatmul.f32.gmra.mxu0 %v625
    %v627 = vpop.f32.mrf.mxu0
    %v628 = vadd.f32 %v415, %v627
    %v629 = vand.u32 %v283, 4294901760
    %630 = vmatmul.f32.gmra.mxu0 %v629
    %v631 = vpop.f32.mrf.mxu0
    %v632 = vadd.f32 %v423, %v631
    %v633 = vand.u32 %v284, 4294901760
    %634 = vmatmul.f32.gmra.mxu0 %v633
    %v635 = vpop.f32.mrf.mxu0
    %v636 = vadd.f32 %v431, %v635
    %v637 = vand.u32 %v285, 4294901760
    %638 = vmatmul.f32.gmra.mxu0 %v637
    %v639 = vpop.f32.mrf.mxu0
    %v640 = vadd.f32 %v439, %v639
    %v641 = vand.u32 %v286, 4294901760
    %642 = vmatmul.f32.gmra.mxu0 %v641
    %v643 = vpop.f32.mrf.mxu0
    %v644 = vadd.f32 %v447, %v643
    %v645 = vand.u32 %v287, 4294901760
    %646 = vmatmul.f32.gmra.mxu0 %v645
    %v647 = vpop.f32.mrf.mxu0
    %v648 = vadd.f32 %v455, %v647
    %v649 = vand.u32 %v288, 4294901760
    %650 = vmatmul.f32.gmra.mxu0 %v649
    %v651 = vpop.f32.mrf.mxu0
    %v652 = vadd.f32 %v463, %v651
    %v653 = vand.u32 %v289, 4294901760
    %654 = vmatmul.f32.gmra.mxu0 %v653
    %v655 = vpop.f32.mrf.mxu0
    %v656 = vadd.f32 %v471, %v655
    %v657 = vand.u32 %v290, 4294901760
    %658 = vmatmul.f32.gmra.mxu0 %v657
    %v659 = vpop.f32.mrf.mxu0
    %v660 = vadd.f32 %v479, %v659
    %v661 = vand.u32 %v291, 4294901760
    %662 = vmatmul.f32.gmra.mxu0 %v661
    %v663 = vpop.f32.mrf.mxu0
    %v664 = vadd.f32 %v487, %v663
    %v665 = vand.u32 %v292, 4294901760
    %666 = vmatmul.f32.gmra.mxu0 %v665
    %v667 = vpop.f32.mrf.mxu0
    %v668 = vadd.f32 %v495, %v667
    %v669 = vand.u32 %v293, 4294901760
    %670 = vmatmul.f32.gmra.mxu0 %v669
    %v671 = vpop.f32.mrf.mxu0
    %v672 = vadd.f32 %v503, %v671
    %v673 = vand.u32 %v294, 4294901760
    %674 = vmatmul.f32.gmra.mxu0 %v673
    %v675 = vpop.f32.mrf.mxu0
    %v676 = vadd.f32 %v511, %v675
    %v677 = vand.u32 %v295, 4294901760
    %678 = vmatmul.f32.gmra.mxu0 %v677
    %v679 = vpop.f32.mrf.mxu0
    %v680 = vadd.f32 %v519, %v679
    %681 = vdwg.mxu0
    %v682 = vand.u32 %v278, 4294901760
    %v683 = vsub.f32 %v278, %v682
    %684 = vmatpush.msra.mxu0 %v683
    %v685 = vand.u32 %v276, 4294901760
    %v686 = vsub.f32 %v276, %v685
    %687 = vmatpush.msra.mxu0 %v686
    %v688 = vand.u32 %v274, 4294901760
    %v689 = vsub.f32 %v274, %v688
    %690 = vmatpush.msra.mxu0 %v689
    %v691 = vand.u32 %v272, 4294901760
    %v692 = vsub.f32 %v272, %v691
    %693 = vmatpush.msra.mxu0 %v692
    %v694 = vand.u32 %v270, 4294901760
    %v695 = vsub.f32 %v270, %v694
    %696 = vmatpush.msra.mxu0 %v695
    %v697 = vand.u32 %v268, 4294901760
    %v698 = vsub.f32 %v268, %v697
    %699 = vmatpush.msra.mxu0 %v698
    %v700 = vand.u32 %v266, 4294901760
    %v701 = vsub.f32 %v266, %v700
    %702 = vmatpush.msra.mxu0 %v701
    %v703 = vand.u32 %v264, 4294901760
    %v704 = vsub.f32 %v264, %v703
    %705 = vmatpush.msra.mxu0 %v704
    %v706 = vand.u32 %v262, 4294901760
    %v707 = vsub.f32 %v262, %v706
    %708 = vmatpush.msra.mxu0 %v707
    %v709 = vand.u32 %v260, 4294901760
    %v710 = vsub.f32 %v260, %v709
    %711 = vmatpush.msra.mxu0 %v710
    %v712 = vand.u32 %v258, 4294901760
    %v713 = vsub.f32 %v258, %v712
    %714 = vmatpush.msra.mxu0 %v713
    %v715 = vand.u32 %v256, 4294901760
    %v716 = vsub.f32 %v256, %v715
    %717 = vmatpush.msra.mxu0 %v716
    %v718 = vand.u32 %v254, 4294901760
    %v719 = vsub.f32 %v254, %v718
    %720 = vmatpush.msra.mxu0 %v719
    %v721 = vand.u32 %v252, 4294901760
    %v722 = vsub.f32 %v252, %v721
    %723 = vmatpush.msra.mxu0 %v722
    %v724 = vand.u32 %v250, 4294901760
    %v725 = vsub.f32 %v250, %v724
    %726 = vmatpush.msra.mxu0 %v725
    %v727 = vand.u32 %v248, 4294901760
    %v728 = vsub.f32 %v248, %v727
    %729 = vmatpush.msra.mxu0 %v728
    %v730 = vand.u32 %v280, 4294901760
    %v731 = vsub.f32 %v280, %v730
    %732 = vmatmul.f32.gmra.mxu0 %v731
    %v733 = vpop.f32.mrf.mxu0
    %v734 = vadd.f32 %v620, %v733
    %v735 = vand.u32 %v281, 4294901760
    %v736 = vsub.f32 %v281, %v735
    %737 = vmatmul.f32.gmra.mxu0 %v736
    %v738 = vpop.f32.mrf.mxu0
    %v739 = vadd.f32 %v624, %v738
    %v740 = vand.u32 %v282, 4294901760
    %v741 = vsub.f32 %v282, %v740
    %742 = vmatmul.f32.gmra.mxu0 %v741
    %v743 = vpop.f32.mrf.mxu0
    %v744 = vadd.f32 %v628, %v743
    %v745 = vand.u32 %v283, 4294901760
    %v746 = vsub.f32 %v283, %v745
    %747 = vmatmul.f32.gmra.mxu0 %v746
    %v748 = vpop.f32.mrf.mxu0
    %v749 = vadd.f32 %v632, %v748
    %v750 = vand.u32 %v284, 4294901760
    %v751 = vsub.f32 %v284, %v750
    %752 = vmatmul.f32.gmra.mxu0 %v751
    %v753 = vpop.f32.mrf.mxu0
    %v754 = vadd.f32 %v636, %v753
    %v755 = vand.u32 %v285, 4294901760
    %v756 = vsub.f32 %v285, %v755
    %757 = vmatmul.f32.gmra.mxu0 %v756
    %v758 = vpop.f32.mrf.mxu0
    %v759 = vadd.f32 %v640, %v758
    %v760 = vand.u32 %v286, 4294901760
    %v761 = vsub.f32 %v286, %v760
    %762 = vmatmul.f32.gmra.mxu0 %v761
    %v763 = vpop.f32.mrf.mxu0
    %v764 = vadd.f32 %v644, %v763
    %v765 = vand.u32 %v287, 4294901760
    %v766 = vsub.f32 %v287, %v765
    %767 = vmatmul.f32.gmra.mxu0 %v766
    %v768 = vpop.f32.mrf.mxu0
    %v769 = vadd.f32 %v648, %v768
    %v770 = vand.u32 %v288, 4294901760
    %v771 = vsub.f32 %v288, %v770
    %772 = vmatmul.f32.gmra.mxu0 %v771
    %v773 = vpop.f32.mrf.mxu0
    %v774 = vadd.f32 %v652, %v773
    %v775 = vand.u32 %v289, 4294901760
    %v776 = vsub.f32 %v289, %v775
    %777 = vmatmul.f32.gmra.mxu0 %v776
    %v778 = vpop.f32.mrf.mxu0
    %v779 = vadd.f32 %v656, %v778
    %v780 = vand.u32 %v290, 4294901760
    %v781 = vsub.f32 %v290, %v780
    %782 = vmatmul.f32.gmra.mxu0 %v781
    %v783 = vpop.f32.mrf.mxu0
    %v784 = vadd.f32 %v660, %v783
    %v785 = vand.u32 %v291, 4294901760
    %v786 = vsub.f32 %v291, %v785
    %787 = vmatmul.f32.gmra.mxu0 %v786
    %v788 = vpop.f32.mrf.mxu0
    %v789 = vadd.f32 %v664, %v788
    %v790 = vand.u32 %v292, 4294901760
    %v791 = vsub.f32 %v292, %v790
    %792 = vmatmul.f32.gmra.mxu0 %v791
    %v793 = vpop.f32.mrf.mxu0
    %v794 = vadd.f32 %v668, %v793
    %v795 = vand.u32 %v293, 4294901760
    %v796 = vsub.f32 %v293, %v795
    %797 = vmatmul.f32.gmra.mxu0 %v796
    %v798 = vpop.f32.mrf.mxu0
    %v799 = vadd.f32 %v672, %v798
    %v800 = vand.u32 %v294, 4294901760
    %v801 = vsub.f32 %v294, %v800
    %802 = vmatmul.f32.gmra.mxu0 %v801
    %v803 = vpop.f32.mrf.mxu0
    %v804 = vadd.f32 %v676, %v803
    %v805 = vand.u32 %v295, 4294901760
    %v806 = vsub.f32 %v295, %v805
    %807 = vmatmul.f32.gmra.mxu0 %v806
    %v808 = vpop.f32.mrf.mxu0
    %v809 = vadd.f32 %v680, %v808
    %810 = vdwg.mxu0
    %v811 = vand.u32 %v278, 4294901760
    %812 = vmatpush.msra.mxu0 %v811
    %v813 = vand.u32 %v276, 4294901760
    %814 = vmatpush.msra.mxu0 %v813
    %v815 = vand.u32 %v274, 4294901760
    %816 = vmatpush.msra.mxu0 %v815
    %v817 = vand.u32 %v272, 4294901760
    %818 = vmatpush.msra.mxu0 %v817
    %v819 = vand.u32 %v270, 4294901760
    %820 = vmatpush.msra.mxu0 %v819
    %v821 = vand.u32 %v268, 4294901760
    %822 = vmatpush.msra.mxu0 %v821
    %v823 = vand.u32 %v266, 4294901760
    %824 = vmatpush.msra.mxu0 %v823
    %v825 = vand.u32 %v264, 4294901760
    %826 = vmatpush.msra.mxu0 %v825
    %v827 = vand.u32 %v262, 4294901760
    %828 = vmatpush.msra.mxu0 %v827
    %v829 = vand.u32 %v260, 4294901760
    %830 = vmatpush.msra.mxu0 %v829
    %v831 = vand.u32 %v258, 4294901760
    %832 = vmatpush.msra.mxu0 %v831
    %v833 = vand.u32 %v256, 4294901760
    %834 = vmatpush.msra.mxu0 %v833
    %v835 = vand.u32 %v254, 4294901760
    %836 = vmatpush.msra.mxu0 %v835
    %v837 = vand.u32 %v252, 4294901760
    %838 = vmatpush.msra.mxu0 %v837
    %v839 = vand.u32 %v250, 4294901760
    %840 = vmatpush.msra.mxu0 %v839
    %v841 = vand.u32 %v248, 4294901760
    %842 = vmatpush.msra.mxu0 %v841
    %v843 = vand.u32 %v280, 4294901760
    %v844 = vsub.f32 %v280, %v843
    %v845 = vand.u32 %v844, 4294901760
    %846 = vmatmul.f32.gmra.mxu0 %v845
    %v847 = vpop.f32.mrf.mxu0
    %v848 = vadd.f32 %v734, %v847
    %v849 = vand.u32 %v281, 4294901760
    %v850 = vsub.f32 %v281, %v849
    %v851 = vand.u32 %v850, 4294901760
    %852 = vmatmul.f32.gmra.mxu0 %v851
    %v853 = vpop.f32.mrf.mxu0
    %v854 = vadd.f32 %v739, %v853
    %v855 = vand.u32 %v282, 4294901760
    %v856 = vsub.f32 %v282, %v855
    %v857 = vand.u32 %v856, 4294901760
    %858 = vmatmul.f32.gmra.mxu0 %v857
    %v859 = vpop.f32.mrf.mxu0
    %v860 = vadd.f32 %v744, %v859
    %v861 = vand.u32 %v283, 4294901760
    %v862 = vsub.f32 %v283, %v861
    %v863 = vand.u32 %v862, 4294901760
    %864 = vmatmul.f32.gmra.mxu0 %v863
    %v865 = vpop.f32.mrf.mxu0
    %v866 = vadd.f32 %v749, %v865
    %v867 = vand.u32 %v284, 4294901760
    %v868 = vsub.f32 %v284, %v867
    %v869 = vand.u32 %v868, 4294901760
    %870 = vmatmul.f32.gmra.mxu0 %v869
    %v871 = vpop.f32.mrf.mxu0
    %v872 = vadd.f32 %v754, %v871
    %v873 = vand.u32 %v285, 4294901760
    %v874 = vsub.f32 %v285, %v873
    %v875 = vand.u32 %v874, 4294901760
    %876 = vmatmul.f32.gmra.mxu0 %v875
    %v877 = vpop.f32.mrf.mxu0
    %v878 = vadd.f32 %v759, %v877
    %v879 = vand.u32 %v286, 4294901760
    %v880 = vsub.f32 %v286, %v879
    %v881 = vand.u32 %v880, 4294901760
    %882 = vmatmul.f32.gmra.mxu0 %v881
    %v883 = vpop.f32.mrf.mxu0
    %v884 = vadd.f32 %v764, %v883
    %v885 = vand.u32 %v287, 4294901760
    %v886 = vsub.f32 %v287, %v885
    %v887 = vand.u32 %v886, 4294901760
    %888 = vmatmul.f32.gmra.mxu0 %v887
    %v889 = vpop.f32.mrf.mxu0
    %v890 = vadd.f32 %v769, %v889
    %v891 = vand.u32 %v288, 4294901760
    %v892 = vsub.f32 %v288, %v891
    %v893 = vand.u32 %v892, 4294901760
    %894 = vmatmul.f32.gmra.mxu0 %v893
    %v895 = vpop.f32.mrf.mxu0
    %v896 = vadd.f32 %v774, %v895
    %v897 = vand.u32 %v289, 4294901760
    %v898 = vsub.f32 %v289, %v897
    %v899 = vand.u32 %v898, 4294901760
    %900 = vmatmul.f32.gmra.mxu0 %v899
    %v901 = vpop.f32.mrf.mxu0
    %v902 = vadd.f32 %v779, %v901
    %v903 = vand.u32 %v290, 4294901760
    %v904 = vsub.f32 %v290, %v903
    %v905 = vand.u32 %v904, 4294901760
    %906 = vmatmul.f32.gmra.mxu0 %v905
    %v907 = vpop.f32.mrf.mxu0
    %v908 = vadd.f32 %v784, %v907
    %v909 = vand.u32 %v291, 4294901760
    %v910 = vsub.f32 %v291, %v909
    %v911 = vand.u32 %v910, 4294901760
    %912 = vmatmul.f32.gmra.mxu0 %v911
    %v913 = vpop.f32.mrf.mxu0
    %v914 = vadd.f32 %v789, %v913
    %v915 = vand.u32 %v292, 4294901760
    %v916 = vsub.f32 %v292, %v915
    %v917 = vand.u32 %v916, 4294901760
    %918 = vmatmul.f32.gmra.mxu0 %v917
    %v919 = vpop.f32.mrf.mxu0
    %v920 = vadd.f32 %v794, %v919
    %v921 = vand.u32 %v293, 4294901760
    %v922 = vsub.f32 %v293, %v921
    %v923 = vand.u32 %v922, 4294901760
    %924 = vmatmul.f32.gmra.mxu0 %v923
    %v925 = vpop.f32.mrf.mxu0
    %v926 = vadd.f32 %v799, %v925
    %v927 = vand.u32 %v294, 4294901760
    %v928 = vsub.f32 %v294, %v927
    %v929 = vand.u32 %v928, 4294901760
    %930 = vmatmul.f32.gmra.mxu0 %v929
    %v931 = vpop.f32.mrf.mxu0
    %v932 = vadd.f32 %v804, %v931
    %v933 = vand.u32 %v295, 4294901760
    %v934 = vsub.f32 %v295, %v933
    %v935 = vand.u32 %v934, 4294901760
    %936 = vmatmul.f32.gmra.mxu0 %v935
    %v937 = vpop.f32.mrf.mxu0
    %v938 = vadd.f32 %v809, %v937
    %939 = vdwg.mxu0
    %v940 = vand.u32 %v278, 4294901760
    %v941 = vsub.f32 %v278, %v940
    %v942 = vand.u32 %v941, 4294901760
    %943 = vmatpush.msra.mxu0 %v942
    %v944 = vand.u32 %v276, 4294901760
    %v945 = vsub.f32 %v276, %v944
    %v946 = vand.u32 %v945, 4294901760
    %947 = vmatpush.msra.mxu0 %v946
    %v948 = vand.u32 %v274, 4294901760
    %v949 = vsub.f32 %v274, %v948
    %v950 = vand.u32 %v949, 4294901760
    %951 = vmatpush.msra.mxu0 %v950
    %v952 = vand.u32 %v272, 4294901760
    %v953 = vsub.f32 %v272, %v952
    %v954 = vand.u32 %v953, 4294901760
    %955 = vmatpush.msra.mxu0 %v954
    %v956 = vand.u32 %v270, 4294901760
    %v957 = vsub.f32 %v270, %v956
    %v958 = vand.u32 %v957, 4294901760
    %959 = vmatpush.msra.mxu0 %v958
    %v960 = vand.u32 %v268, 4294901760
    %v961 = vsub.f32 %v268, %v960
    %v962 = vand.u32 %v961, 4294901760
    %963 = vmatpush.msra.mxu0 %v962
    %v964 = vand.u32 %v266, 4294901760
    %v965 = vsub.f32 %v266, %v964
    %v966 = vand.u32 %v965, 4294901760
    %967 = vmatpush.msra.mxu0 %v966
    %v968 = vand.u32 %v264, 4294901760
    %v969 = vsub.f32 %v264, %v968
    %v970 = vand.u32 %v969, 4294901760
    %971 = vmatpush.msra.mxu0 %v970
    %v972 = vand.u32 %v262, 4294901760
    %v973 = vsub.f32 %v262, %v972
    %v974 = vand.u32 %v973, 4294901760
    %975 = vmatpush.msra.mxu0 %v974
    %v976 = vand.u32 %v260, 4294901760
    %v977 = vsub.f32 %v260, %v976
    %v978 = vand.u32 %v977, 4294901760
    %979 = vmatpush.msra.mxu0 %v978
    %v980 = vand.u32 %v258, 4294901760
    %v981 = vsub.f32 %v258, %v980
    %v982 = vand.u32 %v981, 4294901760
    %983 = vmatpush.msra.mxu0 %v982
    %v984 = vand.u32 %v256, 4294901760
    %v985 = vsub.f32 %v256, %v984
    %v986 = vand.u32 %v985, 4294901760
    %987 = vmatpush.msra.mxu0 %v986
    %v988 = vand.u32 %v254, 4294901760
    %v989 = vsub.f32 %v254, %v988
    %v990 = vand.u32 %v989, 4294901760
    %991 = vmatpush.msra.mxu0 %v990
    %v992 = vand.u32 %v252, 4294901760
    %v993 = vsub.f32 %v252, %v992
    %v994 = vand.u32 %v993, 4294901760
    %995 = vmatpush.msra.mxu0 %v994
    %v996 = vand.u32 %v250, 4294901760
    %v997 = vsub.f32 %v250, %v996
    %v998 = vand.u32 %v997, 4294901760
    %999 = vmatpush.msra.mxu0 %v998
    %v1000 = vand.u32 %v248, 4294901760
    %v1001 = vsub.f32 %v248, %v1000
    %v1002 = vand.u32 %v1001, 4294901760
    %1003 = vmatpush.msra.mxu0 %v1002
    %v1004 = vand.u32 %v280, 4294901760
    %1005 = vmatmul.f32.gmra.mxu0 %v1004
    %v1006 = vpop.f32.mrf.mxu0
    %v1007 = vadd.f32 %v848, %v1006
    %v1008 = vand.u32 %v281, 4294901760
    %1009 = vmatmul.f32.gmra.mxu0 %v1008
    %v1010 = vpop.f32.mrf.mxu0
    %v1011 = vadd.f32 %v854, %v1010
    %v1012 = vand.u32 %v282, 4294901760
    %1013 = vmatmul.f32.gmra.mxu0 %v1012
    %v1014 = vpop.f32.mrf.mxu0
    %v1015 = vadd.f32 %v860, %v1014
    %v1016 = vand.u32 %v283, 4294901760
    %1017 = vmatmul.f32.gmra.mxu0 %v1016
    %v1018 = vpop.f32.mrf.mxu0
    %v1019 = vadd.f32 %v866, %v1018
    %v1020 = vand.u32 %v284, 4294901760
    %1021 = vmatmul.f32.gmra.mxu0 %v1020
    %v1022 = vpop.f32.mrf.mxu0
    %v1023 = vadd.f32 %v872, %v1022
    %v1024 = vand.u32 %v285, 4294901760
    %1025 = vmatmul.f32.gmra.mxu0 %v1024
    %v1026 = vpop.f32.mrf.mxu0
    %v1027 = vadd.f32 %v878, %v1026
    %v1028 = vand.u32 %v286, 4294901760
    %1029 = vmatmul.f32.gmra.mxu0 %v1028
    %v1030 = vpop.f32.mrf.mxu0
    %v1031 = vadd.f32 %v884, %v1030
    %v1032 = vand.u32 %v287, 4294901760
    %1033 = vmatmul.f32.gmra.mxu0 %v1032
    %v1034 = vpop.f32.mrf.mxu0
    %v1035 = vadd.f32 %v890, %v1034
    %v1036 = vand.u32 %v288, 4294901760
    %1037 = vmatmul.f32.gmra.mxu0 %v1036
    %v1038 = vpop.f32.mrf.mxu0
    %v1039 = vadd.f32 %v896, %v1038
    %v1040 = vand.u32 %v289, 4294901760
    %1041 = vmatmul.f32.gmra.mxu0 %v1040
    %v1042 = vpop.f32.mrf.mxu0
    %v1043 = vadd.f32 %v902, %v1042
    %v1044 = vand.u32 %v290, 4294901760
    %1045 = vmatmul.f32.gmra.mxu0 %v1044
    %v1046 = vpop.f32.mrf.mxu0
    %v1047 = vadd.f32 %v908, %v1046
    %v1048 = vand.u32 %v291, 4294901760
    %1049 = vmatmul.f32.gmra.mxu0 %v1048
    %v1050 = vpop.f32.mrf.mxu0
    %v1051 = vadd.f32 %v914, %v1050
    %v1052 = vand.u32 %v292, 4294901760
    %1053 = vmatmul.f32.gmra.mxu0 %v1052
    %v1054 = vpop.f32.mrf.mxu0
    %v1055 = vadd.f32 %v920, %v1054
    %v1056 = vand.u32 %v293, 4294901760
    %1057 = vmatmul.f32.gmra.mxu0 %v1056
    %v1058 = vpop.f32.mrf.mxu0
    %v1059 = vadd.f32 %v926, %v1058
    %v1060 = vand.u32 %v294, 4294901760
    %1061 = vmatmul.f32.gmra.mxu0 %v1060
    %v1062 = vpop.f32.mrf.mxu0
    %v1063 = vadd.f32 %v932, %v1062
    %v1064 = vand.u32 %v295, 4294901760
    %1065 = vmatmul.f32.gmra.mxu0 %v1064
    %v1066 = vpop.f32.mrf.mxu0
    %v1067 = vadd.f32 %v938, %v1066
    %1068 = vdwg.mxu0
    %v1069 = vand.u32 %v278, 4294901760
    %1070 = vmatpush.msra.mxu0 %v1069
    %v1071 = vand.u32 %v276, 4294901760
    %1072 = vmatpush.msra.mxu0 %v1071
    %v1073 = vand.u32 %v274, 4294901760
    %1074 = vmatpush.msra.mxu0 %v1073
    %v1075 = vand.u32 %v272, 4294901760
    %1076 = vmatpush.msra.mxu0 %v1075
    %v1077 = vand.u32 %v270, 4294901760
    %1078 = vmatpush.msra.mxu0 %v1077
    %v1079 = vand.u32 %v268, 4294901760
    %1080 = vmatpush.msra.mxu0 %v1079
    %v1081 = vand.u32 %v266, 4294901760
    %1082 = vmatpush.msra.mxu0 %v1081
    %v1083 = vand.u32 %v264, 4294901760
    %1084 = vmatpush.msra.mxu0 %v1083
    %v1085 = vand.u32 %v262, 4294901760
    %1086 = vmatpush.msra.mxu0 %v1085
    %v1087 = vand.u32 %v260, 4294901760
    %1088 = vmatpush.msra.mxu0 %v1087
    %v1089 = vand.u32 %v258, 4294901760
    %1090 = vmatpush.msra.mxu0 %v1089
    %v1091 = vand.u32 %v256, 4294901760
    %1092 = vmatpush.msra.mxu0 %v1091
    %v1093 = vand.u32 %v254, 4294901760
    %1094 = vmatpush.msra.mxu0 %v1093
    %v1095 = vand.u32 %v252, 4294901760
    %1096 = vmatpush.msra.mxu0 %v1095
    %v1097 = vand.u32 %v250, 4294901760
    %1098 = vmatpush.msra.mxu0 %v1097
    %v1099 = vand.u32 %v248, 4294901760
    %1100 = vmatpush.msra.mxu0 %v1099
    %v1101 = vand.u32 %v280, 4294901760
    %1102 = vmatmul.f32.gmra.mxu0 %v1101
    %v1103 = vpop.f32.mrf.mxu0
    %v1104 = vadd.f32 %v1007, %v1103
    %v1105 = vand.u32 %v281, 4294901760
    %1106 = vmatmul.f32.gmra.mxu0 %v1105
    %v1107 = vpop.f32.mrf.mxu0
    %v1108 = vadd.f32 %v1011, %v1107
    %v1109 = vand.u32 %v282, 4294901760
    %1110 = vmatmul.f32.gmra.mxu0 %v1109
    %v1111 = vpop.f32.mrf.mxu0
    %v1112 = vadd.f32 %v1015, %v1111
    %v1113 = vand.u32 %v283, 4294901760
    %1114 = vmatmul.f32.gmra.mxu0 %v1113
    %v1115 = vpop.f32.mrf.mxu0
    %v1116 = vadd.f32 %v1019, %v1115
    %v1117 = vand.u32 %v284, 4294901760
    %1118 = vmatmul.f32.gmra.mxu0 %v1117
    %v1119 = vpop.f32.mrf.mxu0
    %v1120 = vadd.f32 %v1023, %v1119
    %v1121 = vand.u32 %v285, 4294901760
    %1122 = vmatmul.f32.gmra.mxu0 %v1121
    %v1123 = vpop.f32.mrf.mxu0
    %v1124 = vadd.f32 %v1027, %v1123
    %v1125 = vand.u32 %v286, 4294901760
    %1126 = vmatmul.f32.gmra.mxu0 %v1125
    %v1127 = vpop.f32.mrf.mxu0
    %v1128 = vadd.f32 %v1031, %v1127
    %v1129 = vand.u32 %v287, 4294901760
    %1130 = vmatmul.f32.gmra.mxu0 %v1129
    %v1131 = vpop.f32.mrf.mxu0
    %v1132 = vadd.f32 %v1035, %v1131
    %v1133 = vand.u32 %v288, 4294901760
    %1134 = vmatmul.f32.gmra.mxu0 %v1133
    %v1135 = vpop.f32.mrf.mxu0
    %v1136 = vadd.f32 %v1039, %v1135
    %v1137 = vand.u32 %v289, 4294901760
    %1138 = vmatmul.f32.gmra.mxu0 %v1137
    %v1139 = vpop.f32.mrf.mxu0
    %v1140 = vadd.f32 %v1043, %v1139
    %v1141 = vand.u32 %v290, 4294901760
    %1142 = vmatmul.f32.gmra.mxu0 %v1141
    %v1143 = vpop.f32.mrf.mxu0
    %v1144 = vadd.f32 %v1047, %v1143
    %v1145 = vand.u32 %v291, 4294901760
    %1146 = vmatmul.f32.gmra.mxu0 %v1145
    %v1147 = vpop.f32.mrf.mxu0
    %v1148 = vadd.f32 %v1051, %v1147
    %v1149 = vand.u32 %v292, 4294901760
    %1150 = vmatmul.f32.gmra.mxu0 %v1149
    %v1151 = vpop.f32.mrf.mxu0
    %v1152 = vadd.f32 %v1055, %v1151
    %v1153 = vand.u32 %v293, 4294901760
    %1154 = vmatmul.f32.gmra.mxu0 %v1153
    %v1155 = vpop.f32.mrf.mxu0
    %v1156 = vadd.f32 %v1059, %v1155
    %v1157 = vand.u32 %v294, 4294901760
    %1158 = vmatmul.f32.gmra.mxu0 %v1157
    %v1159 = vpop.f32.mrf.mxu0
    %v1160 = vadd.f32 %v1063, %v1159
    %v1161 = vand.u32 %v295, 4294901760
    %1162 = vmatmul.f32.gmra.mxu0 %v1161
    %v1163 = vpop.f32.mrf.mxu0
    %v1164 = vadd.f32 %v1067, %v1163
    %1165 = vdwg.mxu0
    %v1166 = vand.u32 %v279, 4294901760
    %1167 = vmatpush.msra.mxu0 %v1166
    %v1168 = vand.u32 %v277, 4294901760
    %1169 = vmatpush.msra.mxu0 %v1168
    %v1170 = vand.u32 %v275, 4294901760
    %1171 = vmatpush.msra.mxu0 %v1170
    %v1172 = vand.u32 %v273, 4294901760
    %1173 = vmatpush.msra.mxu0 %v1172
    %v1174 = vand.u32 %v271, 4294901760
    %1175 = vmatpush.msra.mxu0 %v1174
    %v1176 = vand.u32 %v269, 4294901760
    %1177 = vmatpush.msra.mxu0 %v1176
    %v1178 = vand.u32 %v267, 4294901760
    %1179 = vmatpush.msra.mxu0 %v1178
    %v1180 = vand.u32 %v265, 4294901760
    %1181 = vmatpush.msra.mxu0 %v1180
    %v1182 = vand.u32 %v263, 4294901760
    %1183 = vmatpush.msra.mxu0 %v1182
    %v1184 = vand.u32 %v261, 4294901760
    %1185 = vmatpush.msra.mxu0 %v1184
    %v1186 = vand.u32 %v259, 4294901760
    %1187 = vmatpush.msra.mxu0 %v1186
    %v1188 = vand.u32 %v257, 4294901760
    %1189 = vmatpush.msra.mxu0 %v1188
    %v1190 = vand.u32 %v255, 4294901760
    %1191 = vmatpush.msra.mxu0 %v1190
    %v1192 = vand.u32 %v253, 4294901760
    %1193 = vmatpush.msra.mxu0 %v1192
    %v1194 = vand.u32 %v251, 4294901760
    %1195 = vmatpush.msra.mxu0 %v1194
    %v1196 = vand.u32 %v249, 4294901760
    %1197 = vmatpush.msra.mxu0 %v1196
    %v1198 = vand.u32 %v280, 4294901760
    %v1199 = vsub.f32 %v280, %v1198
    %v1200 = vand.u32 %v1199, 4294901760
    %v1201 = vsub.f32 %v1199, %v1200
    %v1202 = vand.u32 %v1201, 4294901760
    %1203 = vmatmul.f32.gmra.mxu0 %v1202
    %v1204 = vpop.f32.mrf.mxu0
    %v1205 = vadd.f32 %v298, %v1204
    %v1206 = vand.u32 %v281, 4294901760
    %v1207 = vsub.f32 %v281, %v1206
    %v1208 = vand.u32 %v1207, 4294901760
    %v1209 = vsub.f32 %v1207, %v1208
    %v1210 = vand.u32 %v1209, 4294901760
    %1211 = vmatmul.f32.gmra.mxu0 %v1210
    %v1212 = vpop.f32.mrf.mxu0
    %v1213 = vadd.f32 %v302, %v1212
    %v1214 = vand.u32 %v282, 4294901760
    %v1215 = vsub.f32 %v282, %v1214
    %v1216 = vand.u32 %v1215, 4294901760
    %v1217 = vsub.f32 %v1215, %v1216
    %v1218 = vand.u32 %v1217, 4294901760
    %1219 = vmatmul.f32.gmra.mxu0 %v1218
    %v1220 = vpop.f32.mrf.mxu0
    %v1221 = vadd.f32 %v306, %v1220
    %v1222 = vand.u32 %v283, 4294901760
    %v1223 = vsub.f32 %v283, %v1222
    %v1224 = vand.u32 %v1223, 4294901760
    %v1225 = vsub.f32 %v1223, %v1224
    %v1226 = vand.u32 %v1225, 4294901760
    %1227 = vmatmul.f32.gmra.mxu0 %v1226
    %v1228 = vpop.f32.mrf.mxu0
    %v1229 = vadd.f32 %v310, %v1228
    %v1230 = vand.u32 %v284, 4294901760
    %v1231 = vsub.f32 %v284, %v1230
    %v1232 = vand.u32 %v1231, 4294901760
    %v1233 = vsub.f32 %v1231, %v1232
    %v1234 = vand.u32 %v1233, 4294901760
    %1235 = vmatmul.f32.gmra.mxu0 %v1234
    %v1236 = vpop.f32.mrf.mxu0
    %v1237 = vadd.f32 %v314, %v1236
    %v1238 = vand.u32 %v285, 4294901760
    %v1239 = vsub.f32 %v285, %v1238
    %v1240 = vand.u32 %v1239, 4294901760
    %v1241 = vsub.f32 %v1239, %v1240
    %v1242 = vand.u32 %v1241, 4294901760
    %1243 = vmatmul.f32.gmra.mxu0 %v1242
    %v1244 = vpop.f32.mrf.mxu0
    %v1245 = vadd.f32 %v318, %v1244
    %v1246 = vand.u32 %v286, 4294901760
    %v1247 = vsub.f32 %v286, %v1246
    %v1248 = vand.u32 %v1247, 4294901760
    %v1249 = vsub.f32 %v1247, %v1248
    %v1250 = vand.u32 %v1249, 4294901760
    %1251 = vmatmul.f32.gmra.mxu0 %v1250
    %v1252 = vpop.f32.mrf.mxu0
    %v1253 = vadd.f32 %v322, %v1252
    %v1254 = vand.u32 %v287, 4294901760
    %v1255 = vsub.f32 %v287, %v1254
    %v1256 = vand.u32 %v1255, 4294901760
    %v1257 = vsub.f32 %v1255, %v1256
    %v1258 = vand.u32 %v1257, 4294901760
    %1259 = vmatmul.f32.gmra.mxu0 %v1258
    %v1260 = vpop.f32.mrf.mxu0
    %v1261 = vadd.f32 %v326, %v1260
    %v1262 = vand.u32 %v288, 4294901760
    %v1263 = vsub.f32 %v288, %v1262
    %v1264 = vand.u32 %v1263, 4294901760
    %v1265 = vsub.f32 %v1263, %v1264
    %v1266 = vand.u32 %v1265, 4294901760
    %1267 = vmatmul.f32.gmra.mxu0 %v1266
    %v1268 = vpop.f32.mrf.mxu0
    %v1269 = vadd.f32 %v330, %v1268
    %v1270 = vand.u32 %v289, 4294901760
    %v1271 = vsub.f32 %v289, %v1270
    %v1272 = vand.u32 %v1271, 4294901760
    %v1273 = vsub.f32 %v1271, %v1272
    %v1274 = vand.u32 %v1273, 4294901760
    %1275 = vmatmul.f32.gmra.mxu0 %v1274
    %v1276 = vpop.f32.mrf.mxu0
    %v1277 = vadd.f32 %v334, %v1276
    %v1278 = vand.u32 %v290, 4294901760
    %v1279 = vsub.f32 %v290, %v1278
    %v1280 = vand.u32 %v1279, 4294901760
    %v1281 = vsub.f32 %v1279, %v1280
    %v1282 = vand.u32 %v1281, 4294901760
    %1283 = vmatmul.f32.gmra.mxu0 %v1282
    %v1284 = vpop.f32.mrf.mxu0
    %v1285 = vadd.f32 %v338, %v1284
    %v1286 = vand.u32 %v291, 4294901760
    %v1287 = vsub.f32 %v291, %v1286
    %v1288 = vand.u32 %v1287, 4294901760
    %v1289 = vsub.f32 %v1287, %v1288
    %v1290 = vand.u32 %v1289, 4294901760
    %1291 = vmatmul.f32.gmra.mxu0 %v1290
    %v1292 = vpop.f32.mrf.mxu0
    %v1293 = vadd.f32 %v342, %v1292
    %v1294 = vand.u32 %v292, 4294901760
    %v1295 = vsub.f32 %v292, %v1294
    %v1296 = vand.u32 %v1295, 4294901760
    %v1297 = vsub.f32 %v1295, %v1296
    %v1298 = vand.u32 %v1297, 4294901760
    %1299 = vmatmul.f32.gmra.mxu0 %v1298
    %v1300 = vpop.f32.mrf.mxu0
    %v1301 = vadd.f32 %v346, %v1300
    %v1302 = vand.u32 %v293, 4294901760
    %v1303 = vsub.f32 %v293, %v1302
    %v1304 = vand.u32 %v1303, 4294901760
    %v1305 = vsub.f32 %v1303, %v1304
    %v1306 = vand.u32 %v1305, 4294901760
    %1307 = vmatmul.f32.gmra.mxu0 %v1306
    %v1308 = vpop.f32.mrf.mxu0
    %v1309 = vadd.f32 %v350, %v1308
    %v1310 = vand.u32 %v294, 4294901760
    %v1311 = vsub.f32 %v294, %v1310
    %v1312 = vand.u32 %v1311, 4294901760
    %v1313 = vsub.f32 %v1311, %v1312
    %v1314 = vand.u32 %v1313, 4294901760
    %1315 = vmatmul.f32.gmra.mxu0 %v1314
    %v1316 = vpop.f32.mrf.mxu0
    %v1317 = vadd.f32 %v354, %v1316
    %v1318 = vand.u32 %v295, 4294901760
    %v1319 = vsub.f32 %v295, %v1318
    %v1320 = vand.u32 %v1319, 4294901760
    %v1321 = vsub.f32 %v1319, %v1320
    %v1322 = vand.u32 %v1321, 4294901760
    %1323 = vmatmul.f32.gmra.mxu0 %v1322
    %v1324 = vpop.f32.mrf.mxu0
    %v1325 = vadd.f32 %v358, %v1324
    %1326 = vdwg.mxu0
    %v1327 = vand.u32 %v279, 4294901760
    %v1328 = vsub.f32 %v279, %v1327
    %v1329 = vand.u32 %v1328, 4294901760
    %v1330 = vsub.f32 %v1328, %v1329
    %v1331 = vand.u32 %v1330, 4294901760
    %1332 = vmatpush.msra.mxu0 %v1331
    %v1333 = vand.u32 %v277, 4294901760
    %v1334 = vsub.f32 %v277, %v1333
    %v1335 = vand.u32 %v1334, 4294901760
    %v1336 = vsub.f32 %v1334, %v1335
    %v1337 = vand.u32 %v1336, 4294901760
    %1338 = vmatpush.msra.mxu0 %v1337
    %v1339 = vand.u32 %v275, 4294901760
    %v1340 = vsub.f32 %v275, %v1339
    %v1341 = vand.u32 %v1340, 4294901760
    %v1342 = vsub.f32 %v1340, %v1341
    %v1343 = vand.u32 %v1342, 4294901760
    %1344 = vmatpush.msra.mxu0 %v1343
    %v1345 = vand.u32 %v273, 4294901760
    %v1346 = vsub.f32 %v273, %v1345
    %v1347 = vand.u32 %v1346, 4294901760
    %v1348 = vsub.f32 %v1346, %v1347
    %v1349 = vand.u32 %v1348, 4294901760
    %1350 = vmatpush.msra.mxu0 %v1349
    %v1351 = vand.u32 %v271, 4294901760
    %v1352 = vsub.f32 %v271, %v1351
    %v1353 = vand.u32 %v1352, 4294901760
    %v1354 = vsub.f32 %v1352, %v1353
    %v1355 = vand.u32 %v1354, 4294901760
    %1356 = vmatpush.msra.mxu0 %v1355
    %v1357 = vand.u32 %v269, 4294901760
    %v1358 = vsub.f32 %v269, %v1357
    %v1359 = vand.u32 %v1358, 4294901760
    %v1360 = vsub.f32 %v1358, %v1359
    %v1361 = vand.u32 %v1360, 4294901760
    %1362 = vmatpush.msra.mxu0 %v1361
    %v1363 = vand.u32 %v267, 4294901760
    %v1364 = vsub.f32 %v267, %v1363
    %v1365 = vand.u32 %v1364, 4294901760
    %v1366 = vsub.f32 %v1364, %v1365
    %v1367 = vand.u32 %v1366, 4294901760
    %1368 = vmatpush.msra.mxu0 %v1367
    %v1369 = vand.u32 %v265, 4294901760
    %v1370 = vsub.f32 %v265, %v1369
    %v1371 = vand.u32 %v1370, 4294901760
    %v1372 = vsub.f32 %v1370, %v1371
    %v1373 = vand.u32 %v1372, 4294901760
    %1374 = vmatpush.msra.mxu0 %v1373
    %v1375 = vand.u32 %v263, 4294901760
    %v1376 = vsub.f32 %v263, %v1375
    %v1377 = vand.u32 %v1376, 4294901760
    %v1378 = vsub.f32 %v1376, %v1377
    %v1379 = vand.u32 %v1378, 4294901760
    %1380 = vmatpush.msra.mxu0 %v1379
    %v1381 = vand.u32 %v261, 4294901760
    %v1382 = vsub.f32 %v261, %v1381
    %v1383 = vand.u32 %v1382, 4294901760
    %v1384 = vsub.f32 %v1382, %v1383
    %v1385 = vand.u32 %v1384, 4294901760
    %1386 = vmatpush.msra.mxu0 %v1385
    %v1387 = vand.u32 %v259, 4294901760
    %v1388 = vsub.f32 %v259, %v1387
    %v1389 = vand.u32 %v1388, 4294901760
    %v1390 = vsub.f32 %v1388, %v1389
    %v1391 = vand.u32 %v1390, 4294901760
    %1392 = vmatpush.msra.mxu0 %v1391
    %v1393 = vand.u32 %v257, 4294901760
    %v1394 = vsub.f32 %v257, %v1393
    %v1395 = vand.u32 %v1394, 4294901760
    %v1396 = vsub.f32 %v1394, %v1395
    %v1397 = vand.u32 %v1396, 4294901760
    %1398 = vmatpush.msra.mxu0 %v1397
    %v1399 = vand.u32 %v255, 4294901760
    %v1400 = vsub.f32 %v255, %v1399
    %v1401 = vand.u32 %v1400, 4294901760
    %v1402 = vsub.f32 %v1400, %v1401
    %v1403 = vand.u32 %v1402, 4294901760
    %1404 = vmatpush.msra.mxu0 %v1403
    %v1405 = vand.u32 %v253, 4294901760
    %v1406 = vsub.f32 %v253, %v1405
    %v1407 = vand.u32 %v1406, 4294901760
    %v1408 = vsub.f32 %v1406, %v1407
    %v1409 = vand.u32 %v1408, 4294901760
    %1410 = vmatpush.msra.mxu0 %v1409
    %v1411 = vand.u32 %v251, 4294901760
    %v1412 = vsub.f32 %v251, %v1411
    %v1413 = vand.u32 %v1412, 4294901760
    %v1414 = vsub.f32 %v1412, %v1413
    %v1415 = vand.u32 %v1414, 4294901760
    %1416 = vmatpush.msra.mxu0 %v1415
    %v1417 = vand.u32 %v249, 4294901760
    %v1418 = vsub.f32 %v249, %v1417
    %v1419 = vand.u32 %v1418, 4294901760
    %v1420 = vsub.f32 %v1418, %v1419
    %v1421 = vand.u32 %v1420, 4294901760
    %1422 = vmatpush.msra.mxu0 %v1421
    %v1423 = vand.u32 %v280, 4294901760
    %1424 = vmatmul.f32.gmra.mxu0 %v1423
    %v1425 = vpop.f32.mrf.mxu0
    %v1426 = vadd.f32 %v1205, %v1425
    %v1427 = vand.u32 %v281, 4294901760
    %1428 = vmatmul.f32.gmra.mxu0 %v1427
    %v1429 = vpop.f32.mrf.mxu0
    %v1430 = vadd.f32 %v1213, %v1429
    %v1431 = vand.u32 %v282, 4294901760
    %1432 = vmatmul.f32.gmra.mxu0 %v1431
    %v1433 = vpop.f32.mrf.mxu0
    %v1434 = vadd.f32 %v1221, %v1433
    %v1435 = vand.u32 %v283, 4294901760
    %1436 = vmatmul.f32.gmra.mxu0 %v1435
    %v1437 = vpop.f32.mrf.mxu0
    %v1438 = vadd.f32 %v1229, %v1437
    %v1439 = vand.u32 %v284, 4294901760
    %1440 = vmatmul.f32.gmra.mxu0 %v1439
    %v1441 = vpop.f32.mrf.mxu0
    %v1442 = vadd.f32 %v1237, %v1441
    %v1443 = vand.u32 %v285, 4294901760
    %1444 = vmatmul.f32.gmra.mxu0 %v1443
    %v1445 = vpop.f32.mrf.mxu0
    %v1446 = vadd.f32 %v1245, %v1445
    %v1447 = vand.u32 %v286, 4294901760
    %1448 = vmatmul.f32.gmra.mxu0 %v1447
    %v1449 = vpop.f32.mrf.mxu0
    %v1450 = vadd.f32 %v1253, %v1449
    %v1451 = vand.u32 %v287, 4294901760
    %1452 = vmatmul.f32.gmra.mxu0 %v1451
    %v1453 = vpop.f32.mrf.mxu0
    %v1454 = vadd.f32 %v1261, %v1453
    %v1455 = vand.u32 %v288, 4294901760
    %1456 = vmatmul.f32.gmra.mxu0 %v1455
    %v1457 = vpop.f32.mrf.mxu0
    %v1458 = vadd.f32 %v1269, %v1457
    %v1459 = vand.u32 %v289, 4294901760
    %1460 = vmatmul.f32.gmra.mxu0 %v1459
    %v1461 = vpop.f32.mrf.mxu0
    %v1462 = vadd.f32 %v1277, %v1461
    %v1463 = vand.u32 %v290, 4294901760
    %1464 = vmatmul.f32.gmra.mxu0 %v1463
    %v1465 = vpop.f32.mrf.mxu0
    %v1466 = vadd.f32 %v1285, %v1465
    %v1467 = vand.u32 %v291, 4294901760
    %1468 = vmatmul.f32.gmra.mxu0 %v1467
    %v1469 = vpop.f32.mrf.mxu0
    %v1470 = vadd.f32 %v1293, %v1469
    %v1471 = vand.u32 %v292, 4294901760
    %1472 = vmatmul.f32.gmra.mxu0 %v1471
    %v1473 = vpop.f32.mrf.mxu0
    %v1474 = vadd.f32 %v1301, %v1473
    %v1475 = vand.u32 %v293, 4294901760
    %1476 = vmatmul.f32.gmra.mxu0 %v1475
    %v1477 = vpop.f32.mrf.mxu0
    %v1478 = vadd.f32 %v1309, %v1477
    %v1479 = vand.u32 %v294, 4294901760
    %1480 = vmatmul.f32.gmra.mxu0 %v1479
    %v1481 = vpop.f32.mrf.mxu0
    %v1482 = vadd.f32 %v1317, %v1481
    %v1483 = vand.u32 %v295, 4294901760
    %1484 = vmatmul.f32.gmra.mxu0 %v1483
    %v1485 = vpop.f32.mrf.mxu0
    %v1486 = vadd.f32 %v1325, %v1485
    %1487 = vdwg.mxu0
    %v1488 = vand.u32 %v279, 4294901760
    %v1489 = vsub.f32 %v279, %v1488
    %1490 = vmatpush.msra.mxu0 %v1489
    %v1491 = vand.u32 %v277, 4294901760
    %v1492 = vsub.f32 %v277, %v1491
    %1493 = vmatpush.msra.mxu0 %v1492
    %v1494 = vand.u32 %v275, 4294901760
    %v1495 = vsub.f32 %v275, %v1494
    %1496 = vmatpush.msra.mxu0 %v1495
    %v1497 = vand.u32 %v273, 4294901760
    %v1498 = vsub.f32 %v273, %v1497
    %1499 = vmatpush.msra.mxu0 %v1498
    %v1500 = vand.u32 %v271, 4294901760
    %v1501 = vsub.f32 %v271, %v1500
    %1502 = vmatpush.msra.mxu0 %v1501
    %v1503 = vand.u32 %v269, 4294901760
    %v1504 = vsub.f32 %v269, %v1503
    %1505 = vmatpush.msra.mxu0 %v1504
    %v1506 = vand.u32 %v267, 4294901760
    %v1507 = vsub.f32 %v267, %v1506
    %1508 = vmatpush.msra.mxu0 %v1507
    %v1509 = vand.u32 %v265, 4294901760
    %v1510 = vsub.f32 %v265, %v1509
    %1511 = vmatpush.msra.mxu0 %v1510
    %v1512 = vand.u32 %v263, 4294901760
    %v1513 = vsub.f32 %v263, %v1512
    %1514 = vmatpush.msra.mxu0 %v1513
    %v1515 = vand.u32 %v261, 4294901760
    %v1516 = vsub.f32 %v261, %v1515
    %1517 = vmatpush.msra.mxu0 %v1516
    %v1518 = vand.u32 %v259, 4294901760
    %v1519 = vsub.f32 %v259, %v1518
    %1520 = vmatpush.msra.mxu0 %v1519
    %v1521 = vand.u32 %v257, 4294901760
    %v1522 = vsub.f32 %v257, %v1521
    %1523 = vmatpush.msra.mxu0 %v1522
    %v1524 = vand.u32 %v255, 4294901760
    %v1525 = vsub.f32 %v255, %v1524
    %1526 = vmatpush.msra.mxu0 %v1525
    %v1527 = vand.u32 %v253, 4294901760
    %v1528 = vsub.f32 %v253, %v1527
    %1529 = vmatpush.msra.mxu0 %v1528
    %v1530 = vand.u32 %v251, 4294901760
    %v1531 = vsub.f32 %v251, %v1530
    %1532 = vmatpush.msra.mxu0 %v1531
    %v1533 = vand.u32 %v249, 4294901760
    %v1534 = vsub.f32 %v249, %v1533
    %1535 = vmatpush.msra.mxu0 %v1534
    %v1536 = vand.u32 %v280, 4294901760
    %v1537 = vsub.f32 %v280, %v1536
    %1538 = vmatmul.f32.gmra.mxu0 %v1537
    %v1539 = vpop.f32.mrf.mxu0
    %v1540 = vadd.f32 %v1426, %v1539
    %v1541 = vand.u32 %v281, 4294901760
    %v1542 = vsub.f32 %v281, %v1541
    %1543 = vmatmul.f32.gmra.mxu0 %v1542
    %v1544 = vpop.f32.mrf.mxu0
    %v1545 = vadd.f32 %v1430, %v1544
    %v1546 = vand.u32 %v282, 4294901760
    %v1547 = vsub.f32 %v282, %v1546
    %1548 = vmatmul.f32.gmra.mxu0 %v1547
    %v1549 = vpop.f32.mrf.mxu0
    %v1550 = vadd.f32 %v1434, %v1549
    %v1551 = vand.u32 %v283, 4294901760
    %v1552 = vsub.f32 %v283, %v1551
    %1553 = vmatmul.f32.gmra.mxu0 %v1552
    %v1554 = vpop.f32.mrf.mxu0
    %v1555 = vadd.f32 %v1438, %v1554
    %v1556 = vand.u32 %v284, 4294901760
    %v1557 = vsub.f32 %v284, %v1556
    %1558 = vmatmul.f32.gmra.mxu0 %v1557
    %v1559 = vpop.f32.mrf.mxu0
    %v1560 = vadd.f32 %v1442, %v1559
    %v1561 = vand.u32 %v285, 4294901760
    %v1562 = vsub.f32 %v285, %v1561
    %1563 = vmatmul.f32.gmra.mxu0 %v1562
    %v1564 = vpop.f32.mrf.mxu0
    %v1565 = vadd.f32 %v1446, %v1564
    %v1566 = vand.u32 %v286, 4294901760
    %v1567 = vsub.f32 %v286, %v1566
    %1568 = vmatmul.f32.gmra.mxu0 %v1567
    %v1569 = vpop.f32.mrf.mxu0
    %v1570 = vadd.f32 %v1450, %v1569
    %v1571 = vand.u32 %v287, 4294901760
    %v1572 = vsub.f32 %v287, %v1571
    %1573 = vmatmul.f32.gmra.mxu0 %v1572
    %v1574 = vpop.f32.mrf.mxu0
    %v1575 = vadd.f32 %v1454, %v1574
    %v1576 = vand.u32 %v288, 4294901760
    %v1577 = vsub.f32 %v288, %v1576
    %1578 = vmatmul.f32.gmra.mxu0 %v1577
    %v1579 = vpop.f32.mrf.mxu0
    %v1580 = vadd.f32 %v1458, %v1579
    %v1581 = vand.u32 %v289, 4294901760
    %v1582 = vsub.f32 %v289, %v1581
    %1583 = vmatmul.f32.gmra.mxu0 %v1582
    %v1584 = vpop.f32.mrf.mxu0
    %v1585 = vadd.f32 %v1462, %v1584
    %v1586 = vand.u32 %v290, 4294901760
    %v1587 = vsub.f32 %v290, %v1586
    %1588 = vmatmul.f32.gmra.mxu0 %v1587
    %v1589 = vpop.f32.mrf.mxu0
    %v1590 = vadd.f32 %v1466, %v1589
    %v1591 = vand.u32 %v291, 4294901760
    %v1592 = vsub.f32 %v291, %v1591
    %1593 = vmatmul.f32.gmra.mxu0 %v1592
    %v1594 = vpop.f32.mrf.mxu0
    %v1595 = vadd.f32 %v1470, %v1594
    %v1596 = vand.u32 %v292, 4294901760
    %v1597 = vsub.f32 %v292, %v1596
    %1598 = vmatmul.f32.gmra.mxu0 %v1597
    %v1599 = vpop.f32.mrf.mxu0
    %v1600 = vadd.f32 %v1474, %v1599
    %v1601 = vand.u32 %v293, 4294901760
    %v1602 = vsub.f32 %v293, %v1601
    %1603 = vmatmul.f32.gmra.mxu0 %v1602
    %v1604 = vpop.f32.mrf.mxu0
    %v1605 = vadd.f32 %v1478, %v1604
    %v1606 = vand.u32 %v294, 4294901760
    %v1607 = vsub.f32 %v294, %v1606
    %1608 = vmatmul.f32.gmra.mxu0 %v1607
    %v1609 = vpop.f32.mrf.mxu0
    %v1610 = vadd.f32 %v1482, %v1609
    %v1611 = vand.u32 %v295, 4294901760
    %v1612 = vsub.f32 %v295, %v1611
    %1613 = vmatmul.f32.gmra.mxu0 %v1612
    %v1614 = vpop.f32.mrf.mxu0
    %v1615 = vadd.f32 %v1486, %v1614
    %1616 = vdwg.mxu0
    %v1617 = vand.u32 %v279, 4294901760
    %1618 = vmatpush.msra.mxu0 %v1617
    %v1619 = vand.u32 %v277, 4294901760
    %1620 = vmatpush.msra.mxu0 %v1619
    %v1621 = vand.u32 %v275, 4294901760
    %1622 = vmatpush.msra.mxu0 %v1621
    %v1623 = vand.u32 %v273, 4294901760
    %1624 = vmatpush.msra.mxu0 %v1623
    %v1625 = vand.u32 %v271, 4294901760
    %1626 = vmatpush.msra.mxu0 %v1625
    %v1627 = vand.u32 %v269, 4294901760
    %1628 = vmatpush.msra.mxu0 %v1627
    %v1629 = vand.u32 %v267, 4294901760
    %1630 = vmatpush.msra.mxu0 %v1629
    %v1631 = vand.u32 %v265, 4294901760
    %1632 = vmatpush.msra.mxu0 %v1631
    %v1633 = vand.u32 %v263, 4294901760
    %1634 = vmatpush.msra.mxu0 %v1633
    %v1635 = vand.u32 %v261, 4294901760
    %1636 = vmatpush.msra.mxu0 %v1635
    %v1637 = vand.u32 %v259, 4294901760
    %1638 = vmatpush.msra.mxu0 %v1637
    %v1639 = vand.u32 %v257, 4294901760
    %1640 = vmatpush.msra.mxu0 %v1639
    %v1641 = vand.u32 %v255, 4294901760
    %1642 = vmatpush.msra.mxu0 %v1641
    %v1643 = vand.u32 %v253, 4294901760
    %1644 = vmatpush.msra.mxu0 %v1643
    %v1645 = vand.u32 %v251, 4294901760
    %1646 = vmatpush.msra.mxu0 %v1645
    %v1647 = vand.u32 %v249, 4294901760
    %1648 = vmatpush.msra.mxu0 %v1647
    %v1649 = vand.u32 %v280, 4294901760
    %v1650 = vsub.f32 %v280, %v1649
    %v1651 = vand.u32 %v1650, 4294901760
    %1652 = vmatmul.f32.gmra.mxu0 %v1651
    %v1653 = vpop.f32.mrf.mxu0
    %v1654 = vadd.f32 %v1540, %v1653
    %v1655 = vand.u32 %v281, 4294901760
    %v1656 = vsub.f32 %v281, %v1655
    %v1657 = vand.u32 %v1656, 4294901760
    %1658 = vmatmul.f32.gmra.mxu0 %v1657
    %v1659 = vpop.f32.mrf.mxu0
    %v1660 = vadd.f32 %v1545, %v1659
    %v1661 = vand.u32 %v282, 4294901760
    %v1662 = vsub.f32 %v282, %v1661
    %v1663 = vand.u32 %v1662, 4294901760
    %1664 = vmatmul.f32.gmra.mxu0 %v1663
    %v1665 = vpop.f32.mrf.mxu0
    %v1666 = vadd.f32 %v1550, %v1665
    %v1667 = vand.u32 %v283, 4294901760
    %v1668 = vsub.f32 %v283, %v1667
    %v1669 = vand.u32 %v1668, 4294901760
    %1670 = vmatmul.f32.gmra.mxu0 %v1669
    %v1671 = vpop.f32.mrf.mxu0
    %v1672 = vadd.f32 %v1555, %v1671
    %v1673 = vand.u32 %v284, 4294901760
    %v1674 = vsub.f32 %v284, %v1673
    %v1675 = vand.u32 %v1674, 4294901760
    %1676 = vmatmul.f32.gmra.mxu0 %v1675
    %v1677 = vpop.f32.mrf.mxu0
    %v1678 = vadd.f32 %v1560, %v1677
    %v1679 = vand.u32 %v285, 4294901760
    %v1680 = vsub.f32 %v285, %v1679
    %v1681 = vand.u32 %v1680, 4294901760
    %1682 = vmatmul.f32.gmra.mxu0 %v1681
    %v1683 = vpop.f32.mrf.mxu0
    %v1684 = vadd.f32 %v1565, %v1683
    %v1685 = vand.u32 %v286, 4294901760
    %v1686 = vsub.f32 %v286, %v1685
    %v1687 = vand.u32 %v1686, 4294901760
    %1688 = vmatmul.f32.gmra.mxu0 %v1687
    %v1689 = vpop.f32.mrf.mxu0
    %v1690 = vadd.f32 %v1570, %v1689
    %v1691 = vand.u32 %v287, 4294901760
    %v1692 = vsub.f32 %v287, %v1691
    %v1693 = vand.u32 %v1692, 4294901760
    %1694 = vmatmul.f32.gmra.mxu0 %v1693
    %v1695 = vpop.f32.mrf.mxu0
    %v1696 = vadd.f32 %v1575, %v1695
    %v1697 = vand.u32 %v288, 4294901760
    %v1698 = vsub.f32 %v288, %v1697
    %v1699 = vand.u32 %v1698, 4294901760
    %1700 = vmatmul.f32.gmra.mxu0 %v1699
    %v1701 = vpop.f32.mrf.mxu0
    %v1702 = vadd.f32 %v1580, %v1701
    %v1703 = vand.u32 %v289, 4294901760
    %v1704 = vsub.f32 %v289, %v1703
    %v1705 = vand.u32 %v1704, 4294901760
    %1706 = vmatmul.f32.gmra.mxu0 %v1705
    %v1707 = vpop.f32.mrf.mxu0
    %v1708 = vadd.f32 %v1585, %v1707
    %v1709 = vand.u32 %v290, 4294901760
    %v1710 = vsub.f32 %v290, %v1709
    %v1711 = vand.u32 %v1710, 4294901760
    %1712 = vmatmul.f32.gmra.mxu0 %v1711
    %v1713 = vpop.f32.mrf.mxu0
    %v1714 = vadd.f32 %v1590, %v1713
    %v1715 = vand.u32 %v291, 4294901760
    %v1716 = vsub.f32 %v291, %v1715
    %v1717 = vand.u32 %v1716, 4294901760
    %1718 = vmatmul.f32.gmra.mxu0 %v1717
    %v1719 = vpop.f32.mrf.mxu0
    %v1720 = vadd.f32 %v1595, %v1719
    %v1721 = vand.u32 %v292, 4294901760
    %v1722 = vsub.f32 %v292, %v1721
    %v1723 = vand.u32 %v1722, 4294901760
    %1724 = vmatmul.f32.gmra.mxu0 %v1723
    %v1725 = vpop.f32.mrf.mxu0
    %v1726 = vadd.f32 %v1600, %v1725
    %v1727 = vand.u32 %v293, 4294901760
    %v1728 = vsub.f32 %v293, %v1727
    %v1729 = vand.u32 %v1728, 4294901760
    %1730 = vmatmul.f32.gmra.mxu0 %v1729
    %v1731 = vpop.f32.mrf.mxu0
    %v1732 = vadd.f32 %v1605, %v1731
    %v1733 = vand.u32 %v294, 4294901760
    %v1734 = vsub.f32 %v294, %v1733
    %v1735 = vand.u32 %v1734, 4294901760
    %1736 = vmatmul.f32.gmra.mxu0 %v1735
    %v1737 = vpop.f32.mrf.mxu0
    %v1738 = vadd.f32 %v1610, %v1737
    %v1739 = vand.u32 %v295, 4294901760
    %v1740 = vsub.f32 %v295, %v1739
    %v1741 = vand.u32 %v1740, 4294901760
    %1742 = vmatmul.f32.gmra.mxu0 %v1741
    %v1743 = vpop.f32.mrf.mxu0
    %v1744 = vadd.f32 %v1615, %v1743
    %1745 = vdwg.mxu0
    %v1746 = vand.u32 %v279, 4294901760
    %v1747 = vsub.f32 %v279, %v1746
    %v1748 = vand.u32 %v1747, 4294901760
    %1749 = vmatpush.msra.mxu0 %v1748
    %v1750 = vand.u32 %v277, 4294901760
    %v1751 = vsub.f32 %v277, %v1750
    %v1752 = vand.u32 %v1751, 4294901760
    %1753 = vmatpush.msra.mxu0 %v1752
    %v1754 = vand.u32 %v275, 4294901760
    %v1755 = vsub.f32 %v275, %v1754
    %v1756 = vand.u32 %v1755, 4294901760
    %1757 = vmatpush.msra.mxu0 %v1756
    %v1758 = vand.u32 %v273, 4294901760
    %v1759 = vsub.f32 %v273, %v1758
    %v1760 = vand.u32 %v1759, 4294901760
    %1761 = vmatpush.msra.mxu0 %v1760
    %v1762 = vand.u32 %v271, 4294901760
    %v1763 = vsub.f32 %v271, %v1762
    %v1764 = vand.u32 %v1763, 4294901760
    %1765 = vmatpush.msra.mxu0 %v1764
    %v1766 = vand.u32 %v269, 4294901760
    %v1767 = vsub.f32 %v269, %v1766
    %v1768 = vand.u32 %v1767, 4294901760
    %1769 = vmatpush.msra.mxu0 %v1768
    %v1770 = vand.u32 %v267, 4294901760
    %v1771 = vsub.f32 %v267, %v1770
    %v1772 = vand.u32 %v1771, 4294901760
    %1773 = vmatpush.msra.mxu0 %v1772
    %v1774 = vand.u32 %v265, 4294901760
    %v1775 = vsub.f32 %v265, %v1774
    %v1776 = vand.u32 %v1775, 4294901760
    %1777 = vmatpush.msra.mxu0 %v1776
    %v1778 = vand.u32 %v263, 4294901760
    %v1779 = vsub.f32 %v263, %v1778
    %v1780 = vand.u32 %v1779, 4294901760
    %1781 = vmatpush.msra.mxu0 %v1780
    %v1782 = vand.u32 %v261, 4294901760
    %v1783 = vsub.f32 %v261, %v1782
    %v1784 = vand.u32 %v1783, 4294901760
    %1785 = vmatpush.msra.mxu0 %v1784
    %v1786 = vand.u32 %v259, 4294901760
    %v1787 = vsub.f32 %v259, %v1786
    %v1788 = vand.u32 %v1787, 4294901760
    %1789 = vmatpush.msra.mxu0 %v1788
    %v1790 = vand.u32 %v257, 4294901760
    %v1791 = vsub.f32 %v257, %v1790
    %v1792 = vand.u32 %v1791, 4294901760
    %1793 = vmatpush.msra.mxu0 %v1792
    %v1794 = vand.u32 %v255, 4294901760
    %v1795 = vsub.f32 %v255, %v1794
    %v1796 = vand.u32 %v1795, 4294901760
    %1797 = vmatpush.msra.mxu0 %v1796
    %v1798 = vand.u32 %v253, 4294901760
    %v1799 = vsub.f32 %v253, %v1798
    %v1800 = vand.u32 %v1799, 4294901760
    %1801 = vmatpush.msra.mxu0 %v1800
    %v1802 = vand.u32 %v251, 4294901760
    %v1803 = vsub.f32 %v251, %v1802
    %v1804 = vand.u32 %v1803, 4294901760
    %1805 = vmatpush.msra.mxu0 %v1804
    %v1806 = vand.u32 %v249, 4294901760
    %v1807 = vsub.f32 %v249, %v1806
    %v1808 = vand.u32 %v1807, 4294901760
    %1809 = vmatpush.msra.mxu0 %v1808
    %v1810 = vand.u32 %v280, 4294901760
    %1811 = vmatmul.f32.gmra.mxu0 %v1810
    %v1812 = vpop.f32.mrf.mxu0
    %v1813 = vadd.f32 %v1654, %v1812
    %v1814 = vand.u32 %v281, 4294901760
    %1815 = vmatmul.f32.gmra.mxu0 %v1814
    %v1816 = vpop.f32.mrf.mxu0
    %v1817 = vadd.f32 %v1660, %v1816
    %v1818 = vand.u32 %v282, 4294901760
    %1819 = vmatmul.f32.gmra.mxu0 %v1818
    %v1820 = vpop.f32.mrf.mxu0
    %v1821 = vadd.f32 %v1666, %v1820
    %v1822 = vand.u32 %v283, 4294901760
    %1823 = vmatmul.f32.gmra.mxu0 %v1822
    %v1824 = vpop.f32.mrf.mxu0
    %v1825 = vadd.f32 %v1672, %v1824
    %v1826 = vand.u32 %v284, 4294901760
    %1827 = vmatmul.f32.gmra.mxu0 %v1826
    %v1828 = vpop.f32.mrf.mxu0
    %v1829 = vadd.f32 %v1678, %v1828
    %v1830 = vand.u32 %v285, 4294901760
    %1831 = vmatmul.f32.gmra.mxu0 %v1830
    %v1832 = vpop.f32.mrf.mxu0
    %v1833 = vadd.f32 %v1684, %v1832
    %v1834 = vand.u32 %v286, 4294901760
    %1835 = vmatmul.f32.gmra.mxu0 %v1834
    %v1836 = vpop.f32.mrf.mxu0
    %v1837 = vadd.f32 %v1690, %v1836
    %v1838 = vand.u32 %v287, 4294901760
    %1839 = vmatmul.f32.gmra.mxu0 %v1838
    %v1840 = vpop.f32.mrf.mxu0
    %v1841 = vadd.f32 %v1696, %v1840
    %v1842 = vand.u32 %v288, 4294901760
    %1843 = vmatmul.f32.gmra.mxu0 %v1842
    %v1844 = vpop.f32.mrf.mxu0
    %v1845 = vadd.f32 %v1702, %v1844
    %v1846 = vand.u32 %v289, 4294901760
    %1847 = vmatmul.f32.gmra.mxu0 %v1846
    %v1848 = vpop.f32.mrf.mxu0
    %v1849 = vadd.f32 %v1708, %v1848
    %v1850 = vand.u32 %v290, 4294901760
    %1851 = vmatmul.f32.gmra.mxu0 %v1850
    %v1852 = vpop.f32.mrf.mxu0
    %v1853 = vadd.f32 %v1714, %v1852
    %v1854 = vand.u32 %v291, 4294901760
    %1855 = vmatmul.f32.gmra.mxu0 %v1854
    %v1856 = vpop.f32.mrf.mxu0
    %v1857 = vadd.f32 %v1720, %v1856
    %v1858 = vand.u32 %v292, 4294901760
    %1859 = vmatmul.f32.gmra.mxu0 %v1858
    %v1860 = vpop.f32.mrf.mxu0
    %v1861 = vadd.f32 %v1726, %v1860
    %v1862 = vand.u32 %v293, 4294901760
    %1863 = vmatmul.f32.gmra.mxu0 %v1862
    %v1864 = vpop.f32.mrf.mxu0
    %v1865 = vadd.f32 %v1732, %v1864
    %v1866 = vand.u32 %v294, 4294901760
    %1867 = vmatmul.f32.gmra.mxu0 %v1866
    %v1868 = vpop.f32.mrf.mxu0
    %v1869 = vadd.f32 %v1738, %v1868
    %v1870 = vand.u32 %v295, 4294901760
    %1871 = vmatmul.f32.gmra.mxu0 %v1870
    %v1872 = vpop.f32.mrf.mxu0
    %v1873 = vadd.f32 %v1744, %v1872
    %1874 = vdwg.mxu0
    %v1875 = vand.u32 %v279, 4294901760
    %1876 = vmatpush.msra.mxu0 %v1875
    %v1877 = vand.u32 %v277, 4294901760
    %1878 = vmatpush.msra.mxu0 %v1877
    %v1879 = vand.u32 %v275, 4294901760
    %1880 = vmatpush.msra.mxu0 %v1879
    %v1881 = vand.u32 %v273, 4294901760
    %1882 = vmatpush.msra.mxu0 %v1881
    %v1883 = vand.u32 %v271, 4294901760
    %1884 = vmatpush.msra.mxu0 %v1883
    %v1885 = vand.u32 %v269, 4294901760
    %1886 = vmatpush.msra.mxu0 %v1885
    %v1887 = vand.u32 %v267, 4294901760
    %1888 = vmatpush.msra.mxu0 %v1887
    %v1889 = vand.u32 %v265, 4294901760
    %1890 = vmatpush.msra.mxu0 %v1889
    %v1891 = vand.u32 %v263, 4294901760
    %1892 = vmatpush.msra.mxu0 %v1891
    %v1893 = vand.u32 %v261, 4294901760
    %1894 = vmatpush.msra.mxu0 %v1893
    %v1895 = vand.u32 %v259, 4294901760
    %1896 = vmatpush.msra.mxu0 %v1895
    %v1897 = vand.u32 %v257, 4294901760
    %1898 = vmatpush.msra.mxu0 %v1897
    %v1899 = vand.u32 %v255, 4294901760
    %1900 = vmatpush.msra.mxu0 %v1899
    %v1901 = vand.u32 %v253, 4294901760
    %1902 = vmatpush.msra.mxu0 %v1901
    %v1903 = vand.u32 %v251, 4294901760
    %1904 = vmatpush.msra.mxu0 %v1903
    %v1905 = vand.u32 %v249, 4294901760
    %1906 = vmatpush.msra.mxu0 %v1905
    %v1907 = vand.u32 %v280, 4294901760
    %1908 = vmatmul.f32.gmra.mxu0 %v1907
    %v1909 = vpop.f32.mrf.mxu0
    %v1910 = vadd.f32 %v1813, %v1909
    %v1911 = vand.u32 %v281, 4294901760
    %1912 = vmatmul.f32.gmra.mxu0 %v1911
    %v1913 = vpop.f32.mrf.mxu0
    %v1914 = vadd.f32 %v1817, %v1913
    %v1915 = vand.u32 %v282, 4294901760
    %1916 = vmatmul.f32.gmra.mxu0 %v1915
    %v1917 = vpop.f32.mrf.mxu0
    %v1918 = vadd.f32 %v1821, %v1917
    %v1919 = vand.u32 %v283, 4294901760
    %1920 = vmatmul.f32.gmra.mxu0 %v1919
    %v1921 = vpop.f32.mrf.mxu0
    %v1922 = vadd.f32 %v1825, %v1921
    %v1923 = vand.u32 %v284, 4294901760
    %1924 = vmatmul.f32.gmra.mxu0 %v1923
    %v1925 = vpop.f32.mrf.mxu0
    %v1926 = vadd.f32 %v1829, %v1925
    %v1927 = vand.u32 %v285, 4294901760
    %1928 = vmatmul.f32.gmra.mxu0 %v1927
    %v1929 = vpop.f32.mrf.mxu0
    %v1930 = vadd.f32 %v1833, %v1929
    %v1931 = vand.u32 %v286, 4294901760
    %1932 = vmatmul.f32.gmra.mxu0 %v1931
    %v1933 = vpop.f32.mrf.mxu0
    %v1934 = vadd.f32 %v1837, %v1933
    %v1935 = vand.u32 %v287, 4294901760
    %1936 = vmatmul.f32.gmra.mxu0 %v1935
    %v1937 = vpop.f32.mrf.mxu0
    %v1938 = vadd.f32 %v1841, %v1937
    %v1939 = vand.u32 %v288, 4294901760
    %1940 = vmatmul.f32.gmra.mxu0 %v1939
    %v1941 = vpop.f32.mrf.mxu0
    %v1942 = vadd.f32 %v1845, %v1941
    %v1943 = vand.u32 %v289, 4294901760
    %1944 = vmatmul.f32.gmra.mxu0 %v1943
    %v1945 = vpop.f32.mrf.mxu0
    %v1946 = vadd.f32 %v1849, %v1945
    %v1947 = vand.u32 %v290, 4294901760
    %1948 = vmatmul.f32.gmra.mxu0 %v1947
    %v1949 = vpop.f32.mrf.mxu0
    %v1950 = vadd.f32 %v1853, %v1949
    %v1951 = vand.u32 %v291, 4294901760
    %1952 = vmatmul.f32.gmra.mxu0 %v1951
    %v1953 = vpop.f32.mrf.mxu0
    %v1954 = vadd.f32 %v1857, %v1953
    %v1955 = vand.u32 %v292, 4294901760
    %1956 = vmatmul.f32.gmra.mxu0 %v1955
    %v1957 = vpop.f32.mrf.mxu0
    %v1958 = vadd.f32 %v1861, %v1957
    %v1959 = vand.u32 %v293, 4294901760
    %1960 = vmatmul.f32.gmra.mxu0 %v1959
    %v1961 = vpop.f32.mrf.mxu0
    %v1962 = vadd.f32 %v1865, %v1961
    %v1963 = vand.u32 %v294, 4294901760
    %1964 = vmatmul.f32.gmra.mxu0 %v1963
    %v1965 = vpop.f32.mrf.mxu0
    %v1966 = vadd.f32 %v1869, %v1965
    %v1967 = vand.u32 %v295, 4294901760
    %1968 = vmatmul.f32.gmra.mxu0 %v1967
    %v1969 = vpop.f32.mrf.mxu0
    %v1970 = vadd.f32 %v1873, %v1969
    %1971 = vdwg.mxu0
    %v1972 = vmax.f32 %v1104, 0.0
    %v1973 = vmax.f32 %v1910, 0.0
    %v1974 = vmax.f32 %v1108, 0.0
    %v1975 = vmax.f32 %v1914, 0.0
    %v1976 = vmax.f32 %v1112, 0.0
    %v1977 = vmax.f32 %v1918, 0.0
    %v1978 = vmax.f32 %v1116, 0.0
    %v1979 = vmax.f32 %v1922, 0.0
    %v1980 = vmax.f32 %v1120, 0.0
    %v1981 = vmax.f32 %v1926, 0.0
    %v1982 = vmax.f32 %v1124, 0.0
    %v1983 = vmax.f32 %v1930, 0.0
    %v1984 = vmax.f32 %v1128, 0.0
    %v1985 = vmax.f32 %v1934, 0.0
    %v1986 = vmax.f32 %v1132, 0.0
    %v1987 = vmax.f32 %v1938, 0.0
    %v1988 = vmax.f32 %v1136, 0.0
    %v1989 = vmax.f32 %v1942, 0.0
    %v1990 = vmax.f32 %v1140, 0.0
    %v1991 = vmax.f32 %v1946, 0.0
    %v1992 = vmax.f32 %v1144, 0.0
    %v1993 = vmax.f32 %v1950, 0.0
    %v1994 = vmax.f32 %v1148, 0.0
    %v1995 = vmax.f32 %v1954, 0.0
    %v1996 = vmax.f32 %v1152, 0.0
    %v1997 = vmax.f32 %v1958, 0.0
    %v1998 = vmax.f32 %v1156, 0.0
    %v1999 = vmax.f32 %v1962, 0.0
    %v2000 = vmax.f32 %v1160, 0.0
    %v2001 = vmax.f32 %v1966, 0.0
    %v2002 = vmax.f32 %v1164, 0.0
    %v2003 = vmax.f32 %v1970, 0.0
    %v2004 = vld [vmem:[%s3] sm:$0x1]
    %v2005 = vand.u32 %v2002, 4294901760
    %2006 = vmatpush.msra.mxu0 %v2005
    %v2007 = vand.u32 %v2000, 4294901760
    %2008 = vmatpush.msra.mxu0 %v2007
    %v2009 = vand.u32 %v1998, 4294901760
    %2010 = vmatpush.msra.mxu0 %v2009
    %v2011 = vand.u32 %v1996, 4294901760
    %2012 = vmatpush.msra.mxu0 %v2011
    %v2013 = vand.u32 %v1994, 4294901760
    %2014 = vmatpush.msra.mxu0 %v2013
    %v2015 = vand.u32 %v1992, 4294901760
    %2016 = vmatpush.msra.mxu0 %v2015
    %v2017 = vand.u32 %v1990, 4294901760
    %2018 = vmatpush.msra.mxu0 %v2017
    %v2019 = vand.u32 %v1988, 4294901760
    %2020 = vmatpush.msra.mxu0 %v2019
    %v2021 = vand.u32 %v1986, 4294901760
    %2022 = vmatpush.msra.mxu0 %v2021
    %v2023 = vand.u32 %v1984, 4294901760
    %2024 = vmatpush.msra.mxu0 %v2023
    %v2025 = vand.u32 %v1982, 4294901760
    %2026 = vmatpush.msra.mxu0 %v2025
    %v2027 = vand.u32 %v1980, 4294901760
    %2028 = vmatpush.msra.mxu0 %v2027
    %v2029 = vand.u32 %v1978, 4294901760
    %2030 = vmatpush.msra.mxu0 %v2029
    %v2031 = vand.u32 %v1976, 4294901760
    %2032 = vmatpush.msra.mxu0 %v2031
    %v2033 = vand.u32 %v1974, 4294901760
    %2034 = vmatpush.msra.mxu0 %v2033
    %v2035 = vand.u32 %v1972, 4294901760
    %2036 = vmatpush.msra.mxu0 %v2035
    %v2037 = vand.u32 %v2004, 4294901760
    %v2038 = vsub.f32 %v2004, %v2037
    %v2039 = vand.u32 %v2038, 4294901760
    %v2040 = vsub.f32 %v2038, %v2039
    %v2041 = vand.u32 %v2040, 4294901760
    %2042 = vmatmul.f32.gmra.mxu0 %v2041
    %v2043 = vpop.f32.mrf.mxu0
    %v2044 = vadd.f32 0.0, %v2043
    %2045 = vdwg.mxu0
    %v2046 = vand.u32 %v2002, 4294901760
    %v2047 = vsub.f32 %v2002, %v2046
    %v2048 = vand.u32 %v2047, 4294901760
    %v2049 = vsub.f32 %v2047, %v2048
    %v2050 = vand.u32 %v2049, 4294901760
    %2051 = vmatpush.msra.mxu0 %v2050
    %v2052 = vand.u32 %v2000, 4294901760
    %v2053 = vsub.f32 %v2000, %v2052
    %v2054 = vand.u32 %v2053, 4294901760
    %v2055 = vsub.f32 %v2053, %v2054
    %v2056 = vand.u32 %v2055, 4294901760
    %2057 = vmatpush.msra.mxu0 %v2056
    %v2058 = vand.u32 %v1998, 4294901760
    %v2059 = vsub.f32 %v1998, %v2058
    %v2060 = vand.u32 %v2059, 4294901760
    %v2061 = vsub.f32 %v2059, %v2060
    %v2062 = vand.u32 %v2061, 4294901760
    %2063 = vmatpush.msra.mxu0 %v2062
    %v2064 = vand.u32 %v1996, 4294901760
    %v2065 = vsub.f32 %v1996, %v2064
    %v2066 = vand.u32 %v2065, 4294901760
    %v2067 = vsub.f32 %v2065, %v2066
    %v2068 = vand.u32 %v2067, 4294901760
    %2069 = vmatpush.msra.mxu0 %v2068
    %v2070 = vand.u32 %v1994, 4294901760
    %v2071 = vsub.f32 %v1994, %v2070
    %v2072 = vand.u32 %v2071, 4294901760
    %v2073 = vsub.f32 %v2071, %v2072
    %v2074 = vand.u32 %v2073, 4294901760
    %2075 = vmatpush.msra.mxu0 %v2074
    %v2076 = vand.u32 %v1992, 4294901760
    %v2077 = vsub.f32 %v1992, %v2076
    %v2078 = vand.u32 %v2077, 4294901760
    %v2079 = vsub.f32 %v2077, %v2078
    %v2080 = vand.u32 %v2079, 4294901760
    %2081 = vmatpush.msra.mxu0 %v2080
    %v2082 = vand.u32 %v1990, 4294901760
    %v2083 = vsub.f32 %v1990, %v2082
    %v2084 = vand.u32 %v2083, 4294901760
    %v2085 = vsub.f32 %v2083, %v2084
    %v2086 = vand.u32 %v2085, 4294901760
    %2087 = vmatpush.msra.mxu0 %v2086
    %v2088 = vand.u32 %v1988, 4294901760
    %v2089 = vsub.f32 %v1988, %v2088
    %v2090 = vand.u32 %v2089, 4294901760
    %v2091 = vsub.f32 %v2089, %v2090
    %v2092 = vand.u32 %v2091, 4294901760
    %2093 = vmatpush.msra.mxu0 %v2092
    %v2094 = vand.u32 %v1986, 4294901760
    %v2095 = vsub.f32 %v1986, %v2094
    %v2096 = vand.u32 %v2095, 4294901760
    %v2097 = vsub.f32 %v2095, %v2096
    %v2098 = vand.u32 %v2097, 4294901760
    %2099 = vmatpush.msra.mxu0 %v2098
    %v2100 = vand.u32 %v1984, 4294901760
    %v2101 = vsub.f32 %v1984, %v2100
    %v2102 = vand.u32 %v2101, 4294901760
    %v2103 = vsub.f32 %v2101, %v2102
    %v2104 = vand.u32 %v2103, 4294901760
    %2105 = vmatpush.msra.mxu0 %v2104
    %v2106 = vand.u32 %v1982, 4294901760
    %v2107 = vsub.f32 %v1982, %v2106
    %v2108 = vand.u32 %v2107, 4294901760
    %v2109 = vsub.f32 %v2107, %v2108
    %v2110 = vand.u32 %v2109, 4294901760
    %2111 = vmatpush.msra.mxu0 %v2110
    %v2112 = vand.u32 %v1980, 4294901760
    %v2113 = vsub.f32 %v1980, %v2112
    %v2114 = vand.u32 %v2113, 4294901760
    %v2115 = vsub.f32 %v2113, %v2114
    %v2116 = vand.u32 %v2115, 4294901760
    %2117 = vmatpush.msra.mxu0 %v2116
    %v2118 = vand.u32 %v1978, 4294901760
    %v2119 = vsub.f32 %v1978, %v2118
    %v2120 = vand.u32 %v2119, 4294901760
    %v2121 = vsub.f32 %v2119, %v2120
    %v2122 = vand.u32 %v2121, 4294901760
    %2123 = vmatpush.msra.mxu0 %v2122
    %v2124 = vand.u32 %v1976, 4294901760
    %v2125 = vsub.f32 %v1976, %v2124
    %v2126 = vand.u32 %v2125, 4294901760
    %v2127 = vsub.f32 %v2125, %v2126
    %v2128 = vand.u32 %v2127, 4294901760
    %2129 = vmatpush.msra.mxu0 %v2128
    %v2130 = vand.u32 %v1974, 4294901760
    %v2131 = vsub.f32 %v1974, %v2130
    %v2132 = vand.u32 %v2131, 4294901760
    %v2133 = vsub.f32 %v2131, %v2132
    %v2134 = vand.u32 %v2133, 4294901760
    %2135 = vmatpush.msra.mxu0 %v2134
    %v2136 = vand.u32 %v1972, 4294901760
    %v2137 = vsub.f32 %v1972, %v2136
    %v2138 = vand.u32 %v2137, 4294901760
    %v2139 = vsub.f32 %v2137, %v2138
    %v2140 = vand.u32 %v2139, 4294901760
    %2141 = vmatpush.msra.mxu0 %v2140
    %v2142 = vand.u32 %v2004, 4294901760
    %2143 = vmatmul.f32.gmra.mxu0 %v2142
    %v2144 = vpop.f32.mrf.mxu0
    %v2145 = vadd.f32 %v2044, %v2144
    %2146 = vdwg.mxu0
    %v2147 = vand.u32 %v2002, 4294901760
    %v2148 = vsub.f32 %v2002, %v2147
    %2149 = vmatpush.msra.mxu0 %v2148
    %v2150 = vand.u32 %v2000, 4294901760
    %v2151 = vsub.f32 %v2000, %v2150
    %2152 = vmatpush.msra.mxu0 %v2151
    %v2153 = vand.u32 %v1998, 4294901760
    %v2154 = vsub.f32 %v1998, %v2153
    %2155 = vmatpush.msra.mxu0 %v2154
    %v2156 = vand.u32 %v1996, 4294901760
    %v2157 = vsub.f32 %v1996, %v2156
    %2158 = vmatpush.msra.mxu0 %v2157
    %v2159 = vand.u32 %v1994, 4294901760
    %v2160 = vsub.f32 %v1994, %v2159
    %2161 = vmatpush.msra.mxu0 %v2160
    %v2162 = vand.u32 %v1992, 4294901760
    %v2163 = vsub.f32 %v1992, %v2162
    %2164 = vmatpush.msra.mxu0 %v2163
    %v2165 = vand.u32 %v1990, 4294901760
    %v2166 = vsub.f32 %v1990, %v2165
    %2167 = vmatpush.msra.mxu0 %v2166
    %v2168 = vand.u32 %v1988, 4294901760
    %v2169 = vsub.f32 %v1988, %v2168
    %2170 = vmatpush.msra.mxu0 %v2169
    %v2171 = vand.u32 %v1986, 4294901760
    %v2172 = vsub.f32 %v1986, %v2171
    %2173 = vmatpush.msra.mxu0 %v2172
    %v2174 = vand.u32 %v1984, 4294901760
    %v2175 = vsub.f32 %v1984, %v2174
    %2176 = vmatpush.msra.mxu0 %v2175
    %v2177 = vand.u32 %v1982, 4294901760
    %v2178 = vsub.f32 %v1982, %v2177
    %2179 = vmatpush.msra.mxu0 %v2178
    %v2180 = vand.u32 %v1980, 4294901760
    %v2181 = vsub.f32 %v1980, %v2180
    %2182 = vmatpush.msra.mxu0 %v2181
    %v2183 = vand.u32 %v1978, 4294901760
    %v2184 = vsub.f32 %v1978, %v2183
    %2185 = vmatpush.msra.mxu0 %v2184
    %v2186 = vand.u32 %v1976, 4294901760
    %v2187 = vsub.f32 %v1976, %v2186
    %2188 = vmatpush.msra.mxu0 %v2187
    %v2189 = vand.u32 %v1974, 4294901760
    %v2190 = vsub.f32 %v1974, %v2189
    %2191 = vmatpush.msra.mxu0 %v2190
    %v2192 = vand.u32 %v1972, 4294901760
    %v2193 = vsub.f32 %v1972, %v2192
    %2194 = vmatpush.msra.mxu0 %v2193
    %v2195 = vand.u32 %v2004, 4294901760
    %v2196 = vsub.f32 %v2004, %v2195
    %2197 = vmatmul.f32.gmra.mxu0 %v2196
    %v2198 = vpop.f32.mrf.mxu0
    %v2199 = vadd.f32 %v2145, %v2198
    %2200 = vdwg.mxu0
    %v2201 = vand.u32 %v2002, 4294901760
    %2202 = vmatpush.msra.mxu0 %v2201
    %v2203 = vand.u32 %v2000, 4294901760
    %2204 = vmatpush.msra.mxu0 %v2203
    %v2205 = vand.u32 %v1998, 4294901760
    %2206 = vmatpush.msra.mxu0 %v2205
    %v2207 = vand.u32 %v1996, 4294901760
    %2208 = vmatpush.msra.mxu0 %v2207
    %v2209 = vand.u32 %v1994, 4294901760
    %2210 = vmatpush.msra.mxu0 %v2209
    %v2211 = vand.u32 %v1992, 4294901760
    %2212 = vmatpush.msra.mxu0 %v2211
    %v2213 = vand.u32 %v1990, 4294901760
    %2214 = vmatpush.msra.mxu0 %v2213
    %v2215 = vand.u32 %v1988, 4294901760
    %2216 = vmatpush.msra.mxu0 %v2215
    %v2217 = vand.u32 %v1986, 4294901760
    %2218 = vmatpush.msra.mxu0 %v2217
    %v2219 = vand.u32 %v1984, 4294901760
    %2220 = vmatpush.msra.mxu0 %v2219
    %v2221 = vand.u32 %v1982, 4294901760
    %2222 = vmatpush.msra.mxu0 %v2221
    %v2223 = vand.u32 %v1980, 4294901760
    %2224 = vmatpush.msra.mxu0 %v2223
    %v2225 = vand.u32 %v1978, 4294901760
    %2226 = vmatpush.msra.mxu0 %v2225
    %v2227 = vand.u32 %v1976, 4294901760
    %2228 = vmatpush.msra.mxu0 %v2227
    %v2229 = vand.u32 %v1974, 4294901760
    %2230 = vmatpush.msra.mxu0 %v2229
    %v2231 = vand.u32 %v1972, 4294901760
    %2232 = vmatpush.msra.mxu0 %v2231
    %v2233 = vand.u32 %v2004, 4294901760
    %v2234 = vsub.f32 %v2004, %v2233
    %v2235 = vand.u32 %v2234, 4294901760
    %2236 = vmatmul.f32.gmra.mxu0 %v2235
    %v2237 = vpop.f32.mrf.mxu0
    %v2238 = vadd.f32 %v2199, %v2237
    %2239 = vdwg.mxu0
    %v2240 = vand.u32 %v2002, 4294901760
    %v2241 = vsub.f32 %v2002, %v2240
    %v2242 = vand.u32 %v2241, 4294901760
    %2243 = vmatpush.msra.mxu0 %v2242
    %v2244 = vand.u32 %v2000, 4294901760
    %v2245 = vsub.f32 %v2000, %v2244
    %v2246 = vand.u32 %v2245, 4294901760
    %2247 = vmatpush.msra.mxu0 %v2246
    %v2248 = vand.u32 %v1998, 4294901760
    %v2249 = vsub.f32 %v1998, %v2248
    %v2250 = vand.u32 %v2249, 4294901760
    %2251 = vmatpush.msra.mxu0 %v2250
    %v2252 = vand.u32 %v1996, 4294901760
    %v2253 = vsub.f32 %v1996, %v2252
    %v2254 = vand.u32 %v2253, 4294901760
    %2255 = vmatpush.msra.mxu0 %v2254
    %v2256 = vand.u32 %v1994, 4294901760
    %v2257 = vsub.f32 %v1994, %v2256
    %v2258 = vand.u32 %v2257, 4294901760
    %2259 = vmatpush.msra.mxu0 %v2258
    %v2260 = vand.u32 %v1992, 4294901760
    %v2261 = vsub.f32 %v1992, %v2260
    %v2262 = vand.u32 %v2261, 4294901760
    %2263 = vmatpush.msra.mxu0 %v2262
    %v2264 = vand.u32 %v1990, 4294901760
    %v2265 = vsub.f32 %v1990, %v2264
    %v2266 = vand.u32 %v2265, 4294901760
    %2267 = vmatpush.msra.mxu0 %v2266
    %v2268 = vand.u32 %v1988, 4294901760
    %v2269 = vsub.f32 %v1988, %v2268
    %v2270 = vand.u32 %v2269, 4294901760
    %2271 = vmatpush.msra.mxu0 %v2270
    %v2272 = vand.u32 %v1986, 4294901760
    %v2273 = vsub.f32 %v1986, %v2272
    %v2274 = vand.u32 %v2273, 4294901760
    %2275 = vmatpush.msra.mxu0 %v2274
    %v2276 = vand.u32 %v1984, 4294901760
    %v2277 = vsub.f32 %v1984, %v2276
    %v2278 = vand.u32 %v2277, 4294901760
    %2279 = vmatpush.msra.mxu0 %v2278
    %v2280 = vand.u32 %v1982, 4294901760
    %v2281 = vsub.f32 %v1982, %v2280
    %v2282 = vand.u32 %v2281, 4294901760
    %2283 = vmatpush.msra.mxu0 %v2282
    %v2284 = vand.u32 %v1980, 4294901760
    %v2285 = vsub.f32 %v1980, %v2284
    %v2286 = vand.u32 %v2285, 4294901760
    %2287 = vmatpush.msra.mxu0 %v2286
    %v2288 = vand.u32 %v1978, 4294901760
    %v2289 = vsub.f32 %v1978, %v2288
    %v2290 = vand.u32 %v2289, 4294901760
    %2291 = vmatpush.msra.mxu0 %v2290
    %v2292 = vand.u32 %v1976, 4294901760
    %v2293 = vsub.f32 %v1976, %v2292
    %v2294 = vand.u32 %v2293, 4294901760
    %2295 = vmatpush.msra.mxu0 %v2294
    %v2296 = vand.u32 %v1974, 4294901760
    %v2297 = vsub.f32 %v1974, %v2296
    %v2298 = vand.u32 %v2297, 4294901760
    %2299 = vmatpush.msra.mxu0 %v2298
    %v2300 = vand.u32 %v1972, 4294901760
    %v2301 = vsub.f32 %v1972, %v2300
    %v2302 = vand.u32 %v2301, 4294901760
    %2303 = vmatpush.msra.mxu0 %v2302
    %v2304 = vand.u32 %v2004, 4294901760
    %2305 = vmatmul.f32.gmra.mxu0 %v2304
    %v2306 = vpop.f32.mrf.mxu0
    %v2307 = vadd.f32 %v2238, %v2306
    %2308 = vdwg.mxu0
    %v2309 = vand.u32 %v2002, 4294901760
    %2310 = vmatpush.msra.mxu0 %v2309
    %v2311 = vand.u32 %v2000, 4294901760
    %2312 = vmatpush.msra.mxu0 %v2311
    %v2313 = vand.u32 %v1998, 4294901760
    %2314 = vmatpush.msra.mxu0 %v2313
    %v2315 = vand.u32 %v1996, 4294901760
    %2316 = vmatpush.msra.mxu0 %v2315
    %v2317 = vand.u32 %v1994, 4294901760
    %2318 = vmatpush.msra.mxu0 %v2317
    %v2319 = vand.u32 %v1992, 4294901760
    %2320 = vmatpush.msra.mxu0 %v2319
    %v2321 = vand.u32 %v1990, 4294901760
    %2322 = vmatpush.msra.mxu0 %v2321
    %v2323 = vand.u32 %v1988, 4294901760
    %2324 = vmatpush.msra.mxu0 %v2323
    %v2325 = vand.u32 %v1986, 4294901760
    %2326 = vmatpush.msra.mxu0 %v2325
    %v2327 = vand.u32 %v1984, 4294901760
    %2328 = vmatpush.msra.mxu0 %v2327
    %v2329 = vand.u32 %v1982, 4294901760
    %2330 = vmatpush.msra.mxu0 %v2329
    %v2331 = vand.u32 %v1980, 4294901760
    %2332 = vmatpush.msra.mxu0 %v2331
    %v2333 = vand.u32 %v1978, 4294901760
    %2334 = vmatpush.msra.mxu0 %v2333
    %v2335 = vand.u32 %v1976, 4294901760
    %2336 = vmatpush.msra.mxu0 %v2335
    %v2337 = vand.u32 %v1974, 4294901760
    %2338 = vmatpush.msra.mxu0 %v2337
    %v2339 = vand.u32 %v1972, 4294901760
    %2340 = vmatpush.msra.mxu0 %v2339
    %v2341 = vand.u32 %v2004, 4294901760
    %2342 = vmatmul.f32.gmra.mxu0 %v2341
    %v2343 = vpop.f32.mrf.mxu0
    %v2344 = vadd.f32 %v2307, %v2343
    %2345 = vdwg.mxu0
    %v2346 = vand.u32 %v2003, 4294901760
    %2347 = vmatpush.msra.mxu0 %v2346
    %v2348 = vand.u32 %v2001, 4294901760
    %2349 = vmatpush.msra.mxu0 %v2348
    %v2350 = vand.u32 %v1999, 4294901760
    %2351 = vmatpush.msra.mxu0 %v2350
    %v2352 = vand.u32 %v1997, 4294901760
    %2353 = vmatpush.msra.mxu0 %v2352
    %v2354 = vand.u32 %v1995, 4294901760
    %2355 = vmatpush.msra.mxu0 %v2354
    %v2356 = vand.u32 %v1993, 4294901760
    %2357 = vmatpush.msra.mxu0 %v2356
    %v2358 = vand.u32 %v1991, 4294901760
    %2359 = vmatpush.msra.mxu0 %v2358
    %v2360 = vand.u32 %v1989, 4294901760
    %2361 = vmatpush.msra.mxu0 %v2360
    %v2362 = vand.u32 %v1987, 4294901760
    %2363 = vmatpush.msra.mxu0 %v2362
    %v2364 = vand.u32 %v1985, 4294901760
    %2365 = vmatpush.msra.mxu0 %v2364
    %v2366 = vand.u32 %v1983, 4294901760
    %2367 = vmatpush.msra.mxu0 %v2366
    %v2368 = vand.u32 %v1981, 4294901760
    %2369 = vmatpush.msra.mxu0 %v2368
    %v2370 = vand.u32 %v1979, 4294901760
    %2371 = vmatpush.msra.mxu0 %v2370
    %v2372 = vand.u32 %v1977, 4294901760
    %2373 = vmatpush.msra.mxu0 %v2372
    %v2374 = vand.u32 %v1975, 4294901760
    %2375 = vmatpush.msra.mxu0 %v2374
    %v2376 = vand.u32 %v1973, 4294901760
    %2377 = vmatpush.msra.mxu0 %v2376
    %v2378 = vand.u32 %v2004, 4294901760
    %v2379 = vsub.f32 %v2004, %v2378
    %v2380 = vand.u32 %v2379, 4294901760
    %v2381 = vsub.f32 %v2379, %v2380
    %v2382 = vand.u32 %v2381, 4294901760
    %2383 = vmatmul.f32.gmra.mxu0 %v2382
    %v2384 = vpop.f32.mrf.mxu0
    %v2385 = vadd.f32 0.0, %v2384
    %2386 = vdwg.mxu0
    %v2387 = vand.u32 %v2003, 4294901760
    %v2388 = vsub.f32 %v2003, %v2387
    %v2389 = vand.u32 %v2388, 4294901760
    %v2390 = vsub.f32 %v2388, %v2389
    %v2391 = vand.u32 %v2390, 4294901760
    %2392 = vmatpush.msra.mxu0 %v2391
    %v2393 = vand.u32 %v2001, 4294901760
    %v2394 = vsub.f32 %v2001, %v2393
    %v2395 = vand.u32 %v2394, 4294901760
    %v2396 = vsub.f32 %v2394, %v2395
    %v2397 = vand.u32 %v2396, 4294901760
    %2398 = vmatpush.msra.mxu0 %v2397
    %v2399 = vand.u32 %v1999, 4294901760
    %v2400 = vsub.f32 %v1999, %v2399
    %v2401 = vand.u32 %v2400, 4294901760
    %v2402 = vsub.f32 %v2400, %v2401
    %v2403 = vand.u32 %v2402, 4294901760
    %2404 = vmatpush.msra.mxu0 %v2403
    %v2405 = vand.u32 %v1997, 4294901760
    %v2406 = vsub.f32 %v1997, %v2405
    %v2407 = vand.u32 %v2406, 4294901760
    %v2408 = vsub.f32 %v2406, %v2407
    %v2409 = vand.u32 %v2408, 4294901760
    %2410 = vmatpush.msra.mxu0 %v2409
    %v2411 = vand.u32 %v1995, 4294901760
    %v2412 = vsub.f32 %v1995, %v2411
    %v2413 = vand.u32 %v2412, 4294901760
    %v2414 = vsub.f32 %v2412, %v2413
    %v2415 = vand.u32 %v2414, 4294901760
    %2416 = vmatpush.msra.mxu0 %v2415
    %v2417 = vand.u32 %v1993, 4294901760
    %v2418 = vsub.f32 %v1993, %v2417
    %v2419 = vand.u32 %v2418, 4294901760
    %v2420 = vsub.f32 %v2418, %v2419
    %v2421 = vand.u32 %v2420, 4294901760
    %2422 = vmatpush.msra.mxu0 %v2421
    %v2423 = vand.u32 %v1991, 4294901760
    %v2424 = vsub.f32 %v1991, %v2423
    %v2425 = vand.u32 %v2424, 4294901760
    %v2426 = vsub.f32 %v2424, %v2425
    %v2427 = vand.u32 %v2426, 4294901760
    %2428 = vmatpush.msra.mxu0 %v2427
    %v2429 = vand.u32 %v1989, 4294901760
    %v2430 = vsub.f32 %v1989, %v2429
    %v2431 = vand.u32 %v2430, 4294901760
    %v2432 = vsub.f32 %v2430, %v2431
    %v2433 = vand.u32 %v2432, 4294901760
    %2434 = vmatpush.msra.mxu0 %v2433
    %v2435 = vand.u32 %v1987, 4294901760
    %v2436 = vsub.f32 %v1987, %v2435
    %v2437 = vand.u32 %v2436, 4294901760
    %v2438 = vsub.f32 %v2436, %v2437
    %v2439 = vand.u32 %v2438, 4294901760
    %2440 = vmatpush.msra.mxu0 %v2439
    %v2441 = vand.u32 %v1985, 4294901760
    %v2442 = vsub.f32 %v1985, %v2441
    %v2443 = vand.u32 %v2442, 4294901760
    %v2444 = vsub.f32 %v2442, %v2443
    %v2445 = vand.u32 %v2444, 4294901760
    %2446 = vmatpush.msra.mxu0 %v2445
    %v2447 = vand.u32 %v1983, 4294901760
    %v2448 = vsub.f32 %v1983, %v2447
    %v2449 = vand.u32 %v2448, 4294901760
    %v2450 = vsub.f32 %v2448, %v2449
    %v2451 = vand.u32 %v2450, 4294901760
    %2452 = vmatpush.msra.mxu0 %v2451
    %v2453 = vand.u32 %v1981, 4294901760
    %v2454 = vsub.f32 %v1981, %v2453
    %v2455 = vand.u32 %v2454, 4294901760
    %v2456 = vsub.f32 %v2454, %v2455
    %v2457 = vand.u32 %v2456, 4294901760
    %2458 = vmatpush.msra.mxu0 %v2457
    %v2459 = vand.u32 %v1979, 4294901760
    %v2460 = vsub.f32 %v1979, %v2459
    %v2461 = vand.u32 %v2460, 4294901760
    %v2462 = vsub.f32 %v2460, %v2461
    %v2463 = vand.u32 %v2462, 4294901760
    %2464 = vmatpush.msra.mxu0 %v2463
    %v2465 = vand.u32 %v1977, 4294901760
    %v2466 = vsub.f32 %v1977, %v2465
    %v2467 = vand.u32 %v2466, 4294901760
    %v2468 = vsub.f32 %v2466, %v2467
    %v2469 = vand.u32 %v2468, 4294901760
    %2470 = vmatpush.msra.mxu0 %v2469
    %v2471 = vand.u32 %v1975, 4294901760
    %v2472 = vsub.f32 %v1975, %v2471
    %v2473 = vand.u32 %v2472, 4294901760
    %v2474 = vsub.f32 %v2472, %v2473
    %v2475 = vand.u32 %v2474, 4294901760
    %2476 = vmatpush.msra.mxu0 %v2475
    %v2477 = vand.u32 %v1973, 4294901760
    %v2478 = vsub.f32 %v1973, %v2477
    %v2479 = vand.u32 %v2478, 4294901760
    %v2480 = vsub.f32 %v2478, %v2479
    %v2481 = vand.u32 %v2480, 4294901760
    %2482 = vmatpush.msra.mxu0 %v2481
    %v2483 = vand.u32 %v2004, 4294901760
    %2484 = vmatmul.f32.gmra.mxu0 %v2483
    %v2485 = vpop.f32.mrf.mxu0
    %v2486 = vadd.f32 %v2385, %v2485
    %2487 = vdwg.mxu0
    %v2488 = vand.u32 %v2003, 4294901760
    %v2489 = vsub.f32 %v2003, %v2488
    %2490 = vmatpush.msra.mxu0 %v2489
    %v2491 = vand.u32 %v2001, 4294901760
    %v2492 = vsub.f32 %v2001, %v2491
    %2493 = vmatpush.msra.mxu0 %v2492
    %v2494 = vand.u32 %v1999, 4294901760
    %v2495 = vsub.f32 %v1999, %v2494
    %2496 = vmatpush.msra.mxu0 %v2495
    %v2497 = vand.u32 %v1997, 4294901760
    %v2498 = vsub.f32 %v1997, %v2497
    %2499 = vmatpush.msra.mxu0 %v2498
    %v2500 = vand.u32 %v1995, 4294901760
    %v2501 = vsub.f32 %v1995, %v2500
    %2502 = vmatpush.msra.mxu0 %v2501
    %v2503 = vand.u32 %v1993, 4294901760
    %v2504 = vsub.f32 %v1993, %v2503
    %2505 = vmatpush.msra.mxu0 %v2504
    %v2506 = vand.u32 %v1991, 4294901760
    %v2507 = vsub.f32 %v1991, %v2506
    %2508 = vmatpush.msra.mxu0 %v2507
    %v2509 = vand.u32 %v1989, 4294901760
    %v2510 = vsub.f32 %v1989, %v2509
    %2511 = vmatpush.msra.mxu0 %v2510
    %v2512 = vand.u32 %v1987, 4294901760
    %v2513 = vsub.f32 %v1987, %v2512
    %2514 = vmatpush.msra.mxu0 %v2513
    %v2515 = vand.u32 %v1985, 4294901760
    %v2516 = vsub.f32 %v1985, %v2515
    %2517 = vmatpush.msra.mxu0 %v2516
    %v2518 = vand.u32 %v1983, 4294901760
    %v2519 = vsub.f32 %v1983, %v2518
    %2520 = vmatpush.msra.mxu0 %v2519
    %v2521 = vand.u32 %v1981, 4294901760
    %v2522 = vsub.f32 %v1981, %v2521
    %2523 = vmatpush.msra.mxu0 %v2522
    %v2524 = vand.u32 %v1979, 4294901760
    %v2525 = vsub.f32 %v1979, %v2524
    %2526 = vmatpush.msra.mxu0 %v2525
    %v2527 = vand.u32 %v1977, 4294901760
    %v2528 = vsub.f32 %v1977, %v2527
    %2529 = vmatpush.msra.mxu0 %v2528
    %v2530 = vand.u32 %v1975, 4294901760
    %v2531 = vsub.f32 %v1975, %v2530
    %2532 = vmatpush.msra.mxu0 %v2531
    %v2533 = vand.u32 %v1973, 4294901760
    %v2534 = vsub.f32 %v1973, %v2533
    %2535 = vmatpush.msra.mxu0 %v2534
    %v2536 = vand.u32 %v2004, 4294901760
    %v2537 = vsub.f32 %v2004, %v2536
    %2538 = vmatmul.f32.gmra.mxu0 %v2537
    %v2539 = vpop.f32.mrf.mxu0
    %v2540 = vadd.f32 %v2486, %v2539
    %2541 = vdwg.mxu0
    %v2542 = vand.u32 %v2003, 4294901760
    %2543 = vmatpush.msra.mxu0 %v2542
    %v2544 = vand.u32 %v2001, 4294901760
    %2545 = vmatpush.msra.mxu0 %v2544
    %v2546 = vand.u32 %v1999, 4294901760
    %2547 = vmatpush.msra.mxu0 %v2546
    %v2548 = vand.u32 %v1997, 4294901760
    %2549 = vmatpush.msra.mxu0 %v2548
    %v2550 = vand.u32 %v1995, 4294901760
    %2551 = vmatpush.msra.mxu0 %v2550
    %v2552 = vand.u32 %v1993, 4294901760
    %2553 = vmatpush.msra.mxu0 %v2552
    %v2554 = vand.u32 %v1991, 4294901760
    %2555 = vmatpush.msra.mxu0 %v2554
    %v2556 = vand.u32 %v1989, 4294901760
    %2557 = vmatpush.msra.mxu0 %v2556
    %v2558 = vand.u32 %v1987, 4294901760
    %2559 = vmatpush.msra.mxu0 %v2558
    %v2560 = vand.u32 %v1985, 4294901760
    %2561 = vmatpush.msra.mxu0 %v2560
    %v2562 = vand.u32 %v1983, 4294901760
    %2563 = vmatpush.msra.mxu0 %v2562
    %v2564 = vand.u32 %v1981, 4294901760
    %2565 = vmatpush.msra.mxu0 %v2564
    %v2566 = vand.u32 %v1979, 4294901760
    %2567 = vmatpush.msra.mxu0 %v2566
    %v2568 = vand.u32 %v1977, 4294901760
    %2569 = vmatpush.msra.mxu0 %v2568
    %v2570 = vand.u32 %v1975, 4294901760
    %2571 = vmatpush.msra.mxu0 %v2570
    %v2572 = vand.u32 %v1973, 4294901760
    %2573 = vmatpush.msra.mxu0 %v2572
    %v2574 = vand.u32 %v2004, 4294901760
    %v2575 = vsub.f32 %v2004, %v2574
    %v2576 = vand.u32 %v2575, 4294901760
    %2577 = vmatmul.f32.gmra.mxu0 %v2576
    %v2578 = vpop.f32.mrf.mxu0
    %v2579 = vadd.f32 %v2540, %v2578
    %2580 = vdwg.mxu0
    %v2581 = vand.u32 %v2003, 4294901760
    %v2582 = vsub.f32 %v2003, %v2581
    %v2583 = vand.u32 %v2582, 4294901760
    %2584 = vmatpush.msra.mxu0 %v2583
    %v2585 = vand.u32 %v2001, 4294901760
    %v2586 = vsub.f32 %v2001, %v2585
    %v2587 = vand.u32 %v2586, 4294901760
    %2588 = vmatpush.msra.mxu0 %v2587
    %v2589 = vand.u32 %v1999, 4294901760
    %v2590 = vsub.f32 %v1999, %v2589
    %v2591 = vand.u32 %v2590, 4294901760
    %2592 = vmatpush.msra.mxu0 %v2591
    %v2593 = vand.u32 %v1997, 4294901760
    %v2594 = vsub.f32 %v1997, %v2593
    %v2595 = vand.u32 %v2594, 4294901760
    %2596 = vmatpush.msra.mxu0 %v2595
    %v2597 = vand.u32 %v1995, 4294901760
    %v2598 = vsub.f32 %v1995, %v2597
    %v2599 = vand.u32 %v2598, 4294901760
    %2600 = vmatpush.msra.mxu0 %v2599
    %v2601 = vand.u32 %v1993, 4294901760
    %v2602 = vsub.f32 %v1993, %v2601
    %v2603 = vand.u32 %v2602, 4294901760
    %2604 = vmatpush.msra.mxu0 %v2603
    %v2605 = vand.u32 %v1991, 4294901760
    %v2606 = vsub.f32 %v1991, %v2605
    %v2607 = vand.u32 %v2606, 4294901760
    %2608 = vmatpush.msra.mxu0 %v2607
    %v2609 = vand.u32 %v1989, 4294901760
    %v2610 = vsub.f32 %v1989, %v2609
    %v2611 = vand.u32 %v2610, 4294901760
    %2612 = vmatpush.msra.mxu0 %v2611
    %v2613 = vand.u32 %v1987, 4294901760
    %v2614 = vsub.f32 %v1987, %v2613
    %v2615 = vand.u32 %v2614, 4294901760
    %2616 = vmatpush.msra.mxu0 %v2615
    %v2617 = vand.u32 %v1985, 4294901760
    %v2618 = vsub.f32 %v1985, %v2617
    %v2619 = vand.u32 %v2618, 4294901760
    %2620 = vmatpush.msra.mxu0 %v2619
    %v2621 = vand.u32 %v1983, 4294901760
    %v2622 = vsub.f32 %v1983, %v2621
    %v2623 = vand.u32 %v2622, 4294901760
    %2624 = vmatpush.msra.mxu0 %v2623
    %v2625 = vand.u32 %v1981, 4294901760
    %v2626 = vsub.f32 %v1981, %v2625
    %v2627 = vand.u32 %v2626, 4294901760
    %2628 = vmatpush.msra.mxu0 %v2627
    %v2629 = vand.u32 %v1979, 4294901760
    %v2630 = vsub.f32 %v1979, %v2629
    %v2631 = vand.u32 %v2630, 4294901760
    %2632 = vmatpush.msra.mxu0 %v2631
    %v2633 = vand.u32 %v1977, 4294901760
    %v2634 = vsub.f32 %v1977, %v2633
    %v2635 = vand.u32 %v2634, 4294901760
    %2636 = vmatpush.msra.mxu0 %v2635
    %v2637 = vand.u32 %v1975, 4294901760
    %v2638 = vsub.f32 %v1975, %v2637
    %v2639 = vand.u32 %v2638, 4294901760
    %2640 = vmatpush.msra.mxu0 %v2639
    %v2641 = vand.u32 %v1973, 4294901760
    %v2642 = vsub.f32 %v1973, %v2641
    %v2643 = vand.u32 %v2642, 4294901760
    %2644 = vmatpush.msra.mxu0 %v2643
    %v2645 = vand.u32 %v2004, 4294901760
    %2646 = vmatmul.f32.gmra.mxu0 %v2645
    %v2647 = vpop.f32.mrf.mxu0
    %v2648 = vadd.f32 %v2579, %v2647
    %2649 = vdwg.mxu0
    %v2650 = vand.u32 %v2003, 4294901760
    %2651 = vmatpush.msra.mxu0 %v2650
    %v2652 = vand.u32 %v2001, 4294901760
    %2653 = vmatpush.msra.mxu0 %v2652
    %v2654 = vand.u32 %v1999, 4294901760
    %2655 = vmatpush.msra.mxu0 %v2654
    %v2656 = vand.u32 %v1997, 4294901760
    %2657 = vmatpush.msra.mxu0 %v2656
    %v2658 = vand.u32 %v1995, 4294901760
    %2659 = vmatpush.msra.mxu0 %v2658
    %v2660 = vand.u32 %v1993, 4294901760
    %2661 = vmatpush.msra.mxu0 %v2660
    %v2662 = vand.u32 %v1991, 4294901760
    %2663 = vmatpush.msra.mxu0 %v2662
    %v2664 = vand.u32 %v1989, 4294901760
    %2665 = vmatpush.msra.mxu0 %v2664
    %v2666 = vand.u32 %v1987, 4294901760
    %2667 = vmatpush.msra.mxu0 %v2666
    %v2668 = vand.u32 %v1985, 4294901760
    %2669 = vmatpush.msra.mxu0 %v2668
    %v2670 = vand.u32 %v1983, 4294901760
    %2671 = vmatpush.msra.mxu0 %v2670
    %v2672 = vand.u32 %v1981, 4294901760
    %2673 = vmatpush.msra.mxu0 %v2672
    %v2674 = vand.u32 %v1979, 4294901760
    %2675 = vmatpush.msra.mxu0 %v2674
    %v2676 = vand.u32 %v1977, 4294901760
    %2677 = vmatpush.msra.mxu0 %v2676
    %v2678 = vand.u32 %v1975, 4294901760
    %2679 = vmatpush.msra.mxu0 %v2678
    %v2680 = vand.u32 %v1973, 4294901760
    %2681 = vmatpush.msra.mxu0 %v2680
    %v2682 = vand.u32 %v2004, 4294901760
    %2683 = vmatmul.f32.gmra.mxu0 %v2682
    %v2684 = vpop.f32.mrf.mxu0
    %v2685 = vadd.f32 %v2648, %v2684
    %2686 = vdwg.mxu0
    %v2689 = vrot.slane %v2685, 7
    %vm2690 = vcmask 1040384
    %v2691 = vsel %vm2690, %v2344, %v2689
    %v2693 = vlaneseq
    %vm2694 = vcmp.ge.s32.totalorder %v2693, 0
    %vm2695 = vcmp.lt.s32.totalorder %v2693, 256
    %vm2696 = vmand %vm2694, %vm2695
    %2697 = vst.msk [vmem:[#allocation2] sm:$0x3] %vm2696, %v2691
    // Predicated region
    $region18: #{tpu_custom_call.1} parent=1 // pred_check
      _
    $region19: #{tpu_custom_call.1} parent=1 // pred_check_branch
      %2699 = sbr.rel (0) target = $region21
    $region20: #{tpu_custom_call.1} parent=1 // pred_region
      %2701 = vsyncadd [#allocation3], 0
      %s2703 = sshll.u32 [#allocation2], 4
      %s2704 = int_to_ptr.vmem [resolvable:$true] %s2703
      %s2705 = sshll.u32 %s4, 4
      %s2706 = int_to_ptr.hbm [resolvable:$true] %s2705
      %2708 = dma.vmem_to_hbm [thread:$0]  %s2704, 32, %s2706, [#allocation3]
    $region21: #{tpu_custom_call.1} parent=1 // pred_fallthru
      _
    // Predicated region
    $region22: #{tpu_custom_call.1} parent=1 // pred_check
      _
    $region23: #{tpu_custom_call.1} parent=1 // pred_check_branch
      %2710 = sbr.rel (0) target = $region25
    $region24: #{tpu_custom_call.1} parent=1 // pred_region
      %2712 = dma.done [#allocation3], 32
    $region25: #{tpu_custom_call.1} parent=1 // pred_fallthru
      _
    %2713 = vsyncpa [#allocation3], 1

</llo_original>
